<compile_context>
chip_gen: v5e
topology: v5e:2x2
jax: 0.10.0
libtpu: 0.0.40
codegen_flags: <defaults>
</compile_context>

<pallas_src>
import math

import jax
import jax.numpy as jnp
from jax import lax
from jax.experimental import pallas as pl
from jax.experimental.pallas import tpu as pltpu

_INV_SQRT2 = 1.0 / math.sqrt(2.0)


def _gelu(x):
    # exact (erf-based) GELU, matching torch.nn.GELU() default
    return 0.5 * x * (1.0 + lax.erf(x * _INV_SQRT2))


def _round_up(n, m):
    return ((n + m - 1) // m) * m


def _pick_tile(B):
    """Batch tile: multiple of 8, up to 512 rows; prefer >=2 grid tiles for v7x megacore."""
    TB = min(512, _round_up(B, 8))
    if B > 8 and pl.cdiv(B, TB) < 2:
        TB = _round_up(pl.cdiv(B, 2), 8)
    return TB


def _fn_kernel(x_ref, w1_ref, b1_ref, w2_ref, b2_ref, out_ref):
    """One batch tile of the fused fn: Linear -> GELU -> L2Norm -> Linear."""
    x = x_ref[...]                                                   # (TB, D) f32
    # Linear -> GELU (bf16 MXU operands, f32 accumulation; elementwise stays f32)
    h = jnp.dot(x.astype(jnp.bfloat16), w1_ref[...],
                preferred_element_type=jnp.float32) + b1_ref[...]    # (TB, HID)
    h = _gelu(h)
    # L2Norm over dim=1: x / clamp(||x||, 1e-6)  ==  x * rsqrt(clamp(||x||^2, 1e-12))
    sumsq = jnp.sum(h * h, axis=1, keepdims=True)
    h = h * lax.rsqrt(jnp.maximum(sumsq, 1e-12))
    # second Linear back to D (lane-dense output, multiple of 128)
    y = jnp.dot(h.astype(jnp.bfloat16), w2_ref[...],
                preferred_element_type=jnp.float32) + b2_ref[...]    # (TB, D)
    out_ref[...] = y.astype(out_ref.dtype)


def _fn_pallas(x, w1, b1, w2, b2):
    """Pallas launch of the fused fn; only traced/executed on the apply branch."""
    B = x.shape[0]
    D = math.prod(x.shape[1:])
    HID = w1.shape[1]

    x_flat = x.reshape(B, D)              # torch.flatten(1) equivalent (view under jit, no copy)

    TB = _pick_tile(B)
    num_tiles = pl.cdiv(B, TB)            # ragged last block handled by Pallas (per-row transform)

    flops = 4 * B * D * HID               # two matmuls
    transcendentals = B * (HID + 1)       # erf per hidden element + rsqrt per row
    bytes_accessed = (2 * B * D * 4       # x in + y out, f32
                      + w1.size * 2 + w2.size * 2 + b1.size * 4 + b2.size * 4)

    y = pl.pallas_call(
        _fn_kernel,
        out_shape=jax.ShapeDtypeStruct((B, D), x.dtype),
        grid=(num_tiles,),
        in_specs=[
            pl.BlockSpec((TB, D), lambda i: (i, 0)),       # x: batch-tiled, double-buffered
            pl.BlockSpec((D, HID), lambda i: (0, 0)),      # w1: VMEM-resident (constant index_map)
            pl.BlockSpec((1, HID), lambda i: (0, 0)),      # b1
            pl.BlockSpec((HID, D), lambda i: (0, 0)),      # w2
            pl.BlockSpec((1, D), lambda i: (0, 0)),        # b2
        ],
        out_specs=pl.BlockSpec((TB, D), lambda i: (i, 0)),
        compiler_params=pltpu.CompilerParams(
            dimension_semantics=("parallel",),             # independent batch tiles -> megacore
            vmem_limit_bytes=32 * 1024 * 1024,
        ),
        cost_estimate=pl.CostEstimate(
            flops=flops, transcendentals=transcendentals, bytes_accessed=bytes_accessed),
    )(x_flat, w1, b1, w2, b2)

    return y.reshape(x.shape)


@jax.jit
def _random_apply_impl(x, apply, w1, b1, w2, b2):
    """RandomApply body: apply==True -> fused fn(x) Pallas kernel; else zero-cost identity."""
    return lax.cond(
        apply,
        lambda xx: _fn_pallas(xx, w1, b1, w2, b2),
        lambda xx: xx,                    # skip branch: no kernel launch, no HBM traffic
        x,
    )


def random_apply(x, params, p, key):
    """RandomApply.forward: with probability p apply fn, else return x unchanged."""
    # torch: `if random.random() > p: return x` -> apply iff u <= p
    # TODO(synk): torch draws from Python's global RNG per call; here the coin comes from an explicit JAX key.
    apply = jax.random.uniform(key, ()) <= p
    w1, b1, w2, b2 = params
    return _random_apply_impl(x, apply, w1, b1, w2, b2)


def _fn_reference(x, params):
    """Pure-JAX reference for the wrapped fn (same bf16-operand / f32-accum numerics)."""
    w1, b1, w2, b2 = params
    B = x.shape[0]
    xf = x.reshape(B, -1)
    h = jnp.dot(xf.astype(jnp.bfloat16), w1, preferred_element_type=jnp.float32) + b1
    h = jax.nn.gelu(h, approximate=False)
    n = jnp.maximum(jnp.linalg.norm(h, axis=1, keepdims=True), 1e-6)
    h = h / n
    y = jnp.dot(h.astype(jnp.bfloat16), w2, preferred_element_type=jnp.float32) + b2
    return y.reshape(x.shape)


if __name__ == "__main__":
    # small shapes consistent with the module's DINO usage (image-like NCHW input)
    B, C, H, W = 2, 4, 16, 16
    D = C * H * W            # 1024  (lane-dense: multiple of 128)
    HID = 256                # hidden width of fn (lane-dense)
    P = 0.3                  # same p as DINO's RandomApply(ColorJitter, p=0.3)

    key = jax.random.PRNGKey(0)
    kx, k1, k2, k3, k4, kb, kcoin = jax.random.split(key, 7)

    x = jax.random.normal(kx, (B, C, H, W), jnp.float32)
    # fn parameters (weights stored (in, out); matmul operands in bf16, biases in f32)
    w1 = (0.02 * jax.random.normal(k1, (D, HID), jnp.float32)).astype(jnp.bfloat16)
    b1 = 0.01 * jax.random.normal(k2, (1, HID), jnp.float32)
    w2 = (0.02 * jax.random.normal(k3, (HID, D), jnp.float32)).astype(jnp.bfloat16)
    b2 = 0.01 * jax.random.normal(k4, (1, D), jnp.float32)
    params = (w1, b1, w2, b2)

    # Exercise BOTH branches of RandomApply deterministically.
    y_apply = _random_apply_impl(x, jnp.asarray(True), *params)
    y_skip = _random_apply_impl(x, jnp.asarray(False), *params)
    jax.block_until_ready((y_apply, y_skip))

    ref_apply = _fn_reference(x, params)
    assert y_apply.shape == x.shape and y_skip.shape == x.shape
    assert jnp.allclose(y_apply, ref_apply, atol=5e-4, rtol=5e-3), "apply-branch mismatch"
    assert bool(jnp.array_equal(y_skip, x)), "skip-branch must be exact identity"

    # Ragged / multi-tile batch (B not a multiple of the tile): exercises the cdiv grid with a
    # partial last block and (where available) >1 grid tiles.
    x_big = jax.random.normal(kb, (10, C, H, W), jnp.float32)
    y_big = _random_apply_impl(x_big, jnp.asarray(True), *params)
    jax.block_until_ready(y_big)
    assert jnp.allclose(y_big, _fn_reference(x_big, params), atol=5e-4, rtol=5e-3), \
        "ragged-batch apply mismatch"

    # The actual RandomApply forward with its probabilistic gate.
    y = random_apply(x, params, P, kcoin)
    jax.block_until_ready(y)
    assert y.shape == x.shape

    print("KERNEL_OK")
</pallas_src>

<mosaic_0001>
module attributes {stable_mosaic.version = 11 : i64} {
  func.func @_fn_kernel(%arg0: i32, %arg1: memref<8x1024xf32, #tpu.memory_space<vmem>>, %arg2: memref<1024x256xbf16, #tpu.memory_space<vmem>>, %arg3: memref<1x256xf32, #tpu.memory_space<vmem>>, %arg4: memref<256x1024xbf16, #tpu.memory_space<vmem>>, %arg5: memref<1x1024xf32, #tpu.memory_space<vmem>>, %arg6: memref<8x1024xf32, #tpu.memory_space<vmem>>) attributes {dimension_semantics = [#tpu.dimension_semantics<parallel>], iteration_bounds = array<i64: 1>, scalar_prefetch = 0 : i64, scratch_operands = 0 : i64, tpu.core_type = #tpu.core_type<tc>, window_params = [{transform_indices = @transform_0, window_bounds = array<i64: 8, 1024>}, {pipeline_mode = #tpu.pipeline_mode<synchronous>, transform_indices = @transform_1, window_bounds = array<i64: 1024, 256>}, {pipeline_mode = #tpu.pipeline_mode<synchronous>, transform_indices = @transform_2, window_bounds = array<i64: 1, 256>}, {pipeline_mode = #tpu.pipeline_mode<synchronous>, transform_indices = @transform_3, window_bounds = array<i64: 256, 1024>}, {pipeline_mode = #tpu.pipeline_mode<synchronous>, transform_indices = @transform_4, window_bounds = array<i64: 1, 1024>}, {transform_indices = @transform_5, window_bounds = array<i64: 8, 1024>}]} {
    %c0 = arith.constant 0 : index
    %c0_0 = arith.constant 0 : index
    %0 = vector.load %arg1[%c0, %c0_0] : memref<8x1024xf32, #tpu.memory_space<vmem>>, vector<8x1024xf32>
    %1 = arith.truncf %0 : vector<8x1024xf32> to vector<8x1024xbf16>
    %c0_1 = arith.constant 0 : index
    %c0_2 = arith.constant 0 : index
    %2 = vector.load %arg2[%c0_1, %c0_2] : memref<1024x256xbf16, #tpu.memory_space<vmem>>, vector<1024x256xbf16>
    %cst = arith.constant dense<0.000000e+00> : vector<8x256xf32>
    %3 = tpu.matmul %1, %2, %cst {dimension_numbers = #tpu.dot_dimension_numbers<[1], [0], [0], [1], [0, 0, 1, 1], [], []>} : vector<8x1024xbf16>, vector<1024x256xbf16>, vector<8x256xf32> -> vector<8x256xf32>
    %c0_3 = arith.constant 0 : index
    %c0_4 = arith.constant 0 : index
    %4 = vector.load %arg3[%c0_3, %c0_4] : memref<1x256xf32, #tpu.memory_space<vmem>>, vector<1x256xf32>
    %5 = vector.broadcast %4 : vector<1x256xf32> to vector<8x256xf32>
    %6 = arith.addf %3, %5 : vector<8x256xf32>
    %cst_5 = arith.constant 5.000000e-01 : f32
    %7 = vector.broadcast %cst_5 : f32 to vector<8x256xf32>
    %8 = arith.mulf %7, %6 : vector<8x256xf32>
    %cst_6 = arith.constant 0.707106769 : f32
    %9 = vector.broadcast %cst_6 : f32 to vector<8x256xf32>
    %10 = arith.mulf %6, %9 : vector<8x256xf32>
    %11 = math.erf %10 : vector<8x256xf32>
    %cst_7 = arith.constant 1.000000e+00 : f32
    %12 = vector.broadcast %cst_7 : f32 to vector<8x256xf32>
    %13 = arith.addf %12, %11 : vector<8x256xf32>
    %14 = arith.mulf %8, %13 : vector<8x256xf32>
    %15 = arith.mulf %14, %14 : vector<8x256xf32>
    %cst_8 = arith.constant dense<0.000000e+00> : vector<8xf32>
    %16 = vector.multi_reduction <add>, %15, %cst_8 [1] : vector<8x256xf32> to vector<8xf32>
    %17 = vector.shape_cast %16 : vector<8xf32> to vector<8x1xf32>
    %cst_9 = arith.constant 9.99999996E-13 : f32
    %18 = vector.broadcast %cst_9 : f32 to vector<8x1xf32>
    %19 = arith.maximumf %17, %18 : vector<8x1xf32>
    %20 = math.rsqrt %19 : vector<8x1xf32>
    %21 = vector.broadcast %20 : vector<8x1xf32> to vector<8x256xf32>
    %22 = arith.mulf %14, %21 : vector<8x256xf32>
    %23 = arith.truncf %22 : vector<8x256xf32> to vector<8x256xbf16>
    %c0_10 = arith.constant 0 : index
    %c0_11 = arith.constant 0 : index
    %24 = vector.load %arg4[%c0_10, %c0_11] : memref<256x1024xbf16, #tpu.memory_space<vmem>>, vector<256x1024xbf16>
    %cst_12 = arith.constant dense<0.000000e+00> : vector<8x1024xf32>
    %25 = tpu.matmul %23, %24, %cst_12 {dimension_numbers = #tpu.dot_dimension_numbers<[1], [0], [0], [1], [0, 0, 1, 1], [], []>} : vector<8x256xbf16>, vector<256x1024xbf16>, vector<8x1024xf32> -> vector<8x1024xf32>
    %c0_13 = arith.constant 0 : index
    %c0_14 = arith.constant 0 : index
    %26 = vector.load %arg5[%c0_13, %c0_14] : memref<1x1024xf32, #tpu.memory_space<vmem>>, vector<1x1024xf32>
    %27 = vector.broadcast %26 : vector<1x1024xf32> to vector<8x1024xf32>
    %28 = arith.addf %25, %27 : vector<8x1024xf32>
    %c0_15 = arith.constant 0 : index
    %c0_16 = arith.constant 0 : index
    %29 = vector.load %arg6[%c0_15, %c0_16] : memref<8x1024xf32, #tpu.memory_space<vmem>>, vector<8x1024xf32>
    tpu.vector_store %arg6[%c0_15, %c0_16], %28 {strides = array<i32>} : memref<8x1024xf32, #tpu.memory_space<vmem>>, vector<8x1024xf32>,
    return
  }
  func.func @transform_0(%arg0: i32) -> (i32, i32) {
    %c0_i32 = arith.constant 0 : i32
    %c0_i32_0 = arith.constant 0 : i32
    return %arg0, %c0_i32 : i32, i32
  }
  func.func @transform_1(%arg0: i32) -> (i32, i32) {
    %c0_i32 = arith.constant 0 : i32
    %c0_i32_0 = arith.constant 0 : i32
    %c0_i32_1 = arith.constant 0 : i32
    return %c0_i32, %c0_i32_0 : i32, i32
  }
  func.func @transform_2(%arg0: i32) -> (i32, i32) {
    %c0_i32 = arith.constant 0 : i32
    %c0_i32_0 = arith.constant 0 : i32
    %c0_i32_1 = arith.constant 0 : i32
    return %c0_i32, %c0_i32_0 : i32, i32
  }
  func.func @transform_3(%arg0: i32) -> (i32, i32) {
    %c0_i32 = arith.constant 0 : i32
    %c0_i32_0 = arith.constant 0 : i32
    %c0_i32_1 = arith.constant 0 : i32
    return %c0_i32, %c0_i32_0 : i32, i32
  }
  func.func @transform_4(%arg0: i32) -> (i32, i32) {
    %c0_i32 = arith.constant 0 : i32
    %c0_i32_0 = arith.constant 0 : i32
    %c0_i32_1 = arith.constant 0 : i32
    return %c0_i32, %c0_i32_0 : i32, i32
  }
  func.func @transform_5(%arg0: i32) -> (i32, i32) {
    %c0_i32 = arith.constant 0 : i32
    %c0_i32_0 = arith.constant 0 : i32
    return %arg0, %c0_i32 : i32, i32
  }
}

</mosaic_0001>

<llo_original>
// kernel: branch_1_fun.1
$region0: #{branch_1_fun.1}
  #allocation0 [shape = 'u32[]', space=smem, size = 0x4, offset = 0x4, fixed_abs, tag = 'smem constant byte address 0x4 - core index']
  #allocation1 [shape = 'u32[72,128]{1,0:T(1,128)}', space=vmem, size = 0x9000, scoped, tag = 'internal scratch']
  %s0 = inlined_call_operand.vmem [shape: f32[2,1024], index: 0, kind: input, shape index: {}]
  %s1 = inlined_call_operand.hbm [shape: bf16[1024,256], index: 1, kind: input, shape index: {}]
  %s2 = inlined_call_operand.vmem [shape: f32[1,256], index: 2, kind: input, shape index: {}]
  %s3 = inlined_call_operand.hbm [shape: bf16[256,1024], index: 3, kind: input, shape index: {}]
  %s4 = inlined_call_operand.vmem [shape: f32[1,1024], index: 4, kind: input, shape index: {}]
  %s5 = inlined_call_operand.vmem [shape: f32[2,1024], index: 5, kind: output, shape index: {}]
  %s6 = sld [smem:[#allocation0]]
  $region57: #{branch_1_fun.1} parent=0
    _
  %s8 = ssub.s32 1, %s6
  %s9 = scalar_select 0, %s8, %s6
  $region1: #{branch_1_fun.1} parent=0
    #allocation2 [shape = 'u8[524288]{0}', space=vmem, size = 0x80000, scoped, tag = 'input window, operand 1, single buffered']
    #allocation3 [shape = 's32[1]{0}', space=sflag, size = 0x4, scoped, tag = 'scoped memory for branch_1_fun.1']
    #allocation4 [shape = 'u8[524288]{0}', space=vmem, size = 0x80000, scoped, tag = 'input window, operand 3, single buffered']
    #allocation5 [shape = 's32[1]{0}', space=sflag, size = 0x4, scoped, tag = 'scoped memory for branch_1_fun.1']
    #allocation6 [shape = 'u8[32768]{0}', space=vmem, size = 0x8000, scoped, tag = 'output window, operand 0, single buffered']
    %10 = vsyncpa [#allocation3], 0
    %11 = vsyncpa [#allocation5], 0
    // Predicated region
    $region2: #{branch_1_fun.1} parent=1 // pred_check
      _
    $region3: #{branch_1_fun.1} parent=1 // pred_check_branch
      %13 = sbr.rel (0) target = $region5
    $region4: #{branch_1_fun.1} parent=1 // pred_region
      _
    $region5: #{branch_1_fun.1} parent=1 // pred_fallthru
      _
    // Predicated region
    $region6: #{branch_1_fun.1} parent=1 // pred_check
      _
    $region7: #{branch_1_fun.1} parent=1 // pred_check_branch
      %15 = sbr.rel (0) target = $region9
    $region8: #{branch_1_fun.1} parent=1 // pred_region
      %17 = vsyncadd [#allocation3], 0
      %s18 = sshll.u32 %s1, 4
      %s19 = int_to_ptr.hbm [resolvable:$true] %s18
      %s20 = sshll.u32 [#allocation2], 4
      %s21 = int_to_ptr.vmem [resolvable:$true] %s20
      %26 = dma.hbm_to_vmem [thread:$0]  %s19, 16384, %s21, [#allocation3], 128, 128, 8
    $region9: #{branch_1_fun.1} parent=1 // pred_fallthru
      _
    // Predicated region
    $region10: #{branch_1_fun.1} parent=1 // pred_check
      _
    $region11: #{branch_1_fun.1} parent=1 // pred_check_branch
      %28 = sbr.rel (0) target = $region13
    $region12: #{branch_1_fun.1} parent=1 // pred_region
      _
    $region13: #{branch_1_fun.1} parent=1 // pred_fallthru
      _
    // Predicated region
    $region14: #{branch_1_fun.1} parent=1 // pred_check
      _
    $region15: #{branch_1_fun.1} parent=1 // pred_check_branch
      %30 = sbr.rel (0) target = $region17
    $region16: #{branch_1_fun.1} parent=1 // pred_region
      %32 = vsyncadd [#allocation5], 0
      %s33 = sshll.u32 %s3, 4
      %s34 = int_to_ptr.hbm [resolvable:$true] %s33
      %s35 = sshll.u32 [#allocation4], 4
      %s36 = int_to_ptr.vmem [resolvable:$true] %s35
      %41 = dma.hbm_to_vmem [thread:$0]  %s34, 16384, %s36, [#allocation5], 512, 512, 32
    $region17: #{branch_1_fun.1} parent=1 // pred_fallthru
      _
    // Predicated region
    $region18: #{branch_1_fun.1} parent=1 // pred_check
      _
    $region19: #{branch_1_fun.1} parent=1 // pred_check_branch
      %43 = sbr.rel (0) target = $region21
    $region20: #{branch_1_fun.1} parent=1 // pred_region
      _
    $region21: #{branch_1_fun.1} parent=1 // pred_fallthru
      _
    // Predicated region
    $region22: #{branch_1_fun.1} parent=1 // pred_check
      _
    $region23: #{branch_1_fun.1} parent=1 // pred_check_branch
      %45 = sbr.rel (0) target = $region25
    $region24: #{branch_1_fun.1} parent=1 // pred_region
      %47 = dma.done [#allocation3], 16384
    $region25: #{branch_1_fun.1} parent=1 // pred_fallthru
      _
    // Predicated region
    $region26: #{branch_1_fun.1} parent=1 // pred_check
      _
    $region27: #{branch_1_fun.1} parent=1 // pred_check_branch
      %49 = sbr.rel (0) target = $region29
    $region28: #{branch_1_fun.1} parent=1 // pred_region
      %51 = dma.done [#allocation5], 16384
    $region29: #{branch_1_fun.1} parent=1 // pred_fallthru
      _
    %v52 = vld [vmem:[%s0] sm:$0xff]
    %v53 = vld [vmem:[%s0 + $0x8] sm:$0xff]
    %v54 = vld [vmem:[%s0 + $0x10] sm:$0xff]
    %v55 = vld [vmem:[%s0 + $0x18] sm:$0xff]
    %v56 = vld [vmem:[%s0 + $0x20] sm:$0xff]
    %v57 = vld [vmem:[%s0 + $0x28] sm:$0xff]
    %v58 = vld [vmem:[%s0 + $0x30] sm:$0xff]
    %v59 = vld [vmem:[%s0 + $0x38] sm:$0xff]
    %68 = vst [vmem:[#allocation1] ss:$4 sm:$0xff] %v52
    %s69 = scalar_lea.vmem [#allocation1], 1
    %70 = vst [vmem:[%s69] ss:$4 sm:$0xff] %v54
    %s71 = scalar_lea.vmem [#allocation1], 2
    %72 = vst [vmem:[%s71] ss:$4 sm:$0xff] %v56
    %s73 = scalar_lea.vmem [#allocation1], 3
    %74 = vst [vmem:[%s73] ss:$4 sm:$0xff] %v58
    %s75 = scalar_lea.vmem [#allocation1], 32
    %76 = vst [vmem:[%s75] ss:$4 sm:$0xff] %v53
    %s77 = scalar_lea.vmem [#allocation1], 33
    %78 = vst [vmem:[%s77] ss:$4 sm:$0xff] %v55
    %s79 = scalar_lea.vmem [#allocation1], 34
    %80 = vst [vmem:[%s79] ss:$4 sm:$0xff] %v57
    %s81 = scalar_lea.vmem [#allocation1], 35
    %82 = vst [vmem:[%s81] ss:$4 sm:$0xff] %v59
    %v83 = vld.sshfl [vmem:[#allocation1] sm:$0xff pattern:$0x73625140]
    %v84 = vld.sshfl [vmem:[#allocation1 + $0x8] sm:$0xff pattern:$0x73625140]
    %v85 = vld.sshfl [vmem:[#allocation1 + $0x10] sm:$0xff pattern:$0x73625140]
    %v86 = vld.sshfl [vmem:[#allocation1 + $0x18] sm:$0xff pattern:$0x73625140]
    %v87 = vld.sshfl [vmem:[#allocation1 + $0x20] sm:$0xff pattern:$0x73625140]
    %v88 = vld.sshfl [vmem:[#allocation1 + $0x28] sm:$0xff pattern:$0x73625140]
    %v89 = vld.sshfl [vmem:[#allocation1 + $0x30] sm:$0xff pattern:$0x73625140]
    %v90 = vld.sshfl [vmem:[#allocation1 + $0x38] sm:$0xff pattern:$0x73625140]
    %v99 = vpack.c.bf16 %v83, %v83
    %v100 = vpack.c.bf16 %v84, %v84
    %v101 = vpack.c.bf16 %v85, %v85
    %v102 = vpack.c.bf16 %v86, %v86
    %v103 = vpack.c.bf16 %v87, %v87
    %v104 = vpack.c.bf16 %v88, %v88
    %v105 = vpack.c.bf16 %v89, %v89
    %v106 = vpack.c.bf16 %v90, %v90
    %v107 = vld [vmem:[#allocation2] sm:$0xff]
    %v108 = vld [vmem:[#allocation2 + $0x8] sm:$0xff]
    %v109 = vld [vmem:[#allocation2 + $0x10] sm:$0xff]
    %v110 = vld [vmem:[#allocation2 + $0x18] sm:$0xff]
    %v111 = vld [vmem:[#allocation2 + $0x20] sm:$0xff]
    %v112 = vld [vmem:[#allocation2 + $0x28] sm:$0xff]
    %v113 = vld [vmem:[#allocation2 + $0x30] sm:$0xff]
    %v114 = vld [vmem:[#allocation2 + $0x38] sm:$0xff]
    %v115 = vld [vmem:[#allocation2 + $0x40] sm:$0xff]
    %v116 = vld [vmem:[#allocation2 + $0x48] sm:$0xff]
    %v117 = vld [vmem:[#allocation2 + $0x50] sm:$0xff]
    %v118 = vld [vmem:[#allocation2 + $0x58] sm:$0xff]
    %v119 = vld [vmem:[#allocation2 + $0x60] sm:$0xff]
    %v120 = vld [vmem:[#allocation2 + $0x68] sm:$0xff]
    %v121 = vld [vmem:[#allocation2 + $0x70] sm:$0xff]
    %v122 = vld [vmem:[#allocation2 + $0x78] sm:$0xff]
    %v123 = vld [vmem:[#allocation2 + $0x80] sm:$0xff]
    %v124 = vld [vmem:[#allocation2 + $0x88] sm:$0xff]
    %v125 = vld [vmem:[#allocation2 + $0x90] sm:$0xff]
    %v126 = vld [vmem:[#allocation2 + $0x98] sm:$0xff]
    %v127 = vld [vmem:[#allocation2 + $0xa0] sm:$0xff]
    %v128 = vld [vmem:[#allocation2 + $0xa8] sm:$0xff]
    %v129 = vld [vmem:[#allocation2 + $0xb0] sm:$0xff]
    %v130 = vld [vmem:[#allocation2 + $0xb8] sm:$0xff]
    %v131 = vld [vmem:[#allocation2 + $0xc0] sm:$0xff]
    %v132 = vld [vmem:[#allocation2 + $0xc8] sm:$0xff]
    %v133 = vld [vmem:[#allocation2 + $0xd0] sm:$0xff]
    %v134 = vld [vmem:[#allocation2 + $0xd8] sm:$0xff]
    %v135 = vld [vmem:[#allocation2 + $0xe0] sm:$0xff]
    %v136 = vld [vmem:[#allocation2 + $0xe8] sm:$0xff]
    %v137 = vld [vmem:[#allocation2 + $0xf0] sm:$0xff]
    %v138 = vld [vmem:[#allocation2 + $0xf8] sm:$0xff]
    %v139 = vld [vmem:[#allocation2 + $0x100] sm:$0xff]
    %v140 = vld [vmem:[#allocation2 + $0x108] sm:$0xff]
    %v141 = vld [vmem:[#allocation2 + $0x110] sm:$0xff]
    %v142 = vld [vmem:[#allocation2 + $0x118] sm:$0xff]
    %v143 = vld [vmem:[#allocation2 + $0x120] sm:$0xff]
    %v144 = vld [vmem:[#allocation2 + $0x128] sm:$0xff]
    %v145 = vld [vmem:[#allocation2 + $0x130] sm:$0xff]
    %v146 = vld [vmem:[#allocation2 + $0x138] sm:$0xff]
    %v147 = vld [vmem:[#allocation2 + $0x140] sm:$0xff]
    %v148 = vld [vmem:[#allocation2 + $0x148] sm:$0xff]
    %v149 = vld [vmem:[#allocation2 + $0x150] sm:$0xff]
    %v150 = vld [vmem:[#allocation2 + $0x158] sm:$0xff]
    %v151 = vld [vmem:[#allocation2 + $0x160] sm:$0xff]
    %v152 = vld [vmem:[#allocation2 + $0x168] sm:$0xff]
    %v153 = vld [vmem:[#allocation2 + $0x170] sm:$0xff]
    %v154 = vld [vmem:[#allocation2 + $0x178] sm:$0xff]
    %v155 = vld [vmem:[#allocation2 + $0x180] sm:$0xff]
    %v156 = vld [vmem:[#allocation2 + $0x188] sm:$0xff]
    %v157 = vld [vmem:[#allocation2 + $0x190] sm:$0xff]
    %v158 = vld [vmem:[#allocation2 + $0x198] sm:$0xff]
    %v159 = vld [vmem:[#allocation2 + $0x1a0] sm:$0xff]
    %v160 = vld [vmem:[#allocation2 + $0x1a8] sm:$0xff]
    %v161 = vld [vmem:[#allocation2 + $0x1b0] sm:$0xff]
    %v162 = vld [vmem:[#allocation2 + $0x1b8] sm:$0xff]
    %v163 = vld [vmem:[#allocation2 + $0x1c0] sm:$0xff]
    %v164 = vld [vmem:[#allocation2 + $0x1c8] sm:$0xff]
    %v165 = vld [vmem:[#allocation2 + $0x1d0] sm:$0xff]
    %v166 = vld [vmem:[#allocation2 + $0x1d8] sm:$0xff]
    %v167 = vld [vmem:[#allocation2 + $0x1e0] sm:$0xff]
    %v168 = vld [vmem:[#allocation2 + $0x1e8] sm:$0xff]
    %v169 = vld [vmem:[#allocation2 + $0x1f0] sm:$0xff]
    %v170 = vld [vmem:[#allocation2 + $0x1f8] sm:$0xff]
    %v171 = vld [vmem:[#allocation2 + $0x200] sm:$0xff]
    %v172 = vld [vmem:[#allocation2 + $0x208] sm:$0xff]
    %v173 = vld [vmem:[#allocation2 + $0x210] sm:$0xff]
    %v174 = vld [vmem:[#allocation2 + $0x218] sm:$0xff]
    %v175 = vld [vmem:[#allocation2 + $0x220] sm:$0xff]
    %v176 = vld [vmem:[#allocation2 + $0x228] sm:$0xff]
    %v177 = vld [vmem:[#allocation2 + $0x230] sm:$0xff]
    %v178 = vld [vmem:[#allocation2 + $0x238] sm:$0xff]
    %v179 = vld [vmem:[#allocation2 + $0x240] sm:$0xff]
    %v180 = vld [vmem:[#allocation2 + $0x248] sm:$0xff]
    %v181 = vld [vmem:[#allocation2 + $0x250] sm:$0xff]
    %v182 = vld [vmem:[#allocation2 + $0x258] sm:$0xff]
    %v183 = vld [vmem:[#allocation2 + $0x260] sm:$0xff]
    %v184 = vld [vmem:[#allocation2 + $0x268] sm:$0xff]
    %v185 = vld [vmem:[#allocation2 + $0x270] sm:$0xff]
    %v186 = vld [vmem:[#allocation2 + $0x278] sm:$0xff]
    %v187 = vld [vmem:[#allocation2 + $0x280] sm:$0xff]
    %v188 = vld [vmem:[#allocation2 + $0x288] sm:$0xff]
    %v189 = vld [vmem:[#allocation2 + $0x290] sm:$0xff]
    %v190 = vld [vmem:[#allocation2 + $0x298] sm:$0xff]
    %v191 = vld [vmem:[#allocation2 + $0x2a0] sm:$0xff]
    %v192 = vld [vmem:[#allocation2 + $0x2a8] sm:$0xff]
    %v193 = vld [vmem:[#allocation2 + $0x2b0] sm:$0xff]
    %v194 = vld [vmem:[#allocation2 + $0x2b8] sm:$0xff]
    %v195 = vld [vmem:[#allocation2 + $0x2c0] sm:$0xff]
    %v196 = vld [vmem:[#allocation2 + $0x2c8] sm:$0xff]
    %v197 = vld [vmem:[#allocation2 + $0x2d0] sm:$0xff]
    %v198 = vld [vmem:[#allocation2 + $0x2d8] sm:$0xff]
    %v199 = vld [vmem:[#allocation2 + $0x2e0] sm:$0xff]
    %v200 = vld [vmem:[#allocation2 + $0x2e8] sm:$0xff]
    %v201 = vld [vmem:[#allocation2 + $0x2f0] sm:$0xff]
    %v202 = vld [vmem:[#allocation2 + $0x2f8] sm:$0xff]
    %v203 = vld [vmem:[#allocation2 + $0x300] sm:$0xff]
    %v204 = vld [vmem:[#allocation2 + $0x308] sm:$0xff]
    %v205 = vld [vmem:[#allocation2 + $0x310] sm:$0xff]
    %v206 = vld [vmem:[#allocation2 + $0x318] sm:$0xff]
    %v207 = vld [vmem:[#allocation2 + $0x320] sm:$0xff]
    %v208 = vld [vmem:[#allocation2 + $0x328] sm:$0xff]
    %v209 = vld [vmem:[#allocation2 + $0x330] sm:$0xff]
    %v210 = vld [vmem:[#allocation2 + $0x338] sm:$0xff]
    %v211 = vld [vmem:[#allocation2 + $0x340] sm:$0xff]
    %v212 = vld [vmem:[#allocation2 + $0x348] sm:$0xff]
    %v213 = vld [vmem:[#allocation2 + $0x350] sm:$0xff]
    %v214 = vld [vmem:[#allocation2 + $0x358] sm:$0xff]
    %v215 = vld [vmem:[#allocation2 + $0x360] sm:$0xff]
    %v216 = vld [vmem:[#allocation2 + $0x368] sm:$0xff]
    %v217 = vld [vmem:[#allocation2 + $0x370] sm:$0xff]
    %v218 = vld [vmem:[#allocation2 + $0x378] sm:$0xff]
    %v219 = vld [vmem:[#allocation2 + $0x380] sm:$0xff]
    %v220 = vld [vmem:[#allocation2 + $0x388] sm:$0xff]
    %v221 = vld [vmem:[#allocation2 + $0x390] sm:$0xff]
    %v222 = vld [vmem:[#allocation2 + $0x398] sm:$0xff]
    %v223 = vld [vmem:[#allocation2 + $0x3a0] sm:$0xff]
    %v224 = vld [vmem:[#allocation2 + $0x3a8] sm:$0xff]
    %v225 = vld [vmem:[#allocation2 + $0x3b0] sm:$0xff]
    %v226 = vld [vmem:[#allocation2 + $0x3b8] sm:$0xff]
    %v227 = vld [vmem:[#allocation2 + $0x3c0] sm:$0xff]
    %v228 = vld [vmem:[#allocation2 + $0x3c8] sm:$0xff]
    %v229 = vld [vmem:[#allocation2 + $0x3d0] sm:$0xff]
    %v230 = vld [vmem:[#allocation2 + $0x3d8] sm:$0xff]
    %v231 = vld [vmem:[#allocation2 + $0x3e0] sm:$0xff]
    %v232 = vld [vmem:[#allocation2 + $0x3e8] sm:$0xff]
    %v233 = vld [vmem:[#allocation2 + $0x3f0] sm:$0xff]
    %v234 = vld [vmem:[#allocation2 + $0x3f8] sm:$0xff]
    %v235 = vld [vmem:[%s2] sm:$0x3]
    %v237 = vperm.slane %v235, 0
    %v238 = vperm.slane %v235, 1
    %v369 = vunpack.c.l.b16 %v107
    %v370 = vunpack.c.h.b16 %v107
    %v371 = vunpack.c.l.b16 %v108
    %v372 = vunpack.c.h.b16 %v108
    %v373 = vunpack.c.l.b16 %v109
    %v374 = vunpack.c.h.b16 %v109
    %v375 = vunpack.c.l.b16 %v110
    %v376 = vunpack.c.h.b16 %v110
    %v377 = vunpack.c.l.b16 %v111
    %v378 = vunpack.c.h.b16 %v111
    %v379 = vunpack.c.l.b16 %v112
    %v380 = vunpack.c.h.b16 %v112
    %v381 = vunpack.c.l.b16 %v113
    %v382 = vunpack.c.h.b16 %v113
    %v383 = vunpack.c.l.b16 %v114
    %v384 = vunpack.c.h.b16 %v114
    %v385 = vunpack.c.l.b16 %v115
    %v386 = vunpack.c.h.b16 %v115
    %v387 = vunpack.c.l.b16 %v116
    %v388 = vunpack.c.h.b16 %v116
    %v389 = vunpack.c.l.b16 %v117
    %v390 = vunpack.c.h.b16 %v117
    %v391 = vunpack.c.l.b16 %v118
    %v392 = vunpack.c.h.b16 %v118
    %v393 = vunpack.c.l.b16 %v119
    %v394 = vunpack.c.h.b16 %v119
    %v395 = vunpack.c.l.b16 %v120
    %v396 = vunpack.c.h.b16 %v120
    %v397 = vunpack.c.l.b16 %v121
    %v398 = vunpack.c.h.b16 %v121
    %v399 = vunpack.c.l.b16 %v122
    %v400 = vunpack.c.h.b16 %v122
    %v401 = vunpack.c.l.b16 %v123
    %v402 = vunpack.c.h.b16 %v123
    %v403 = vunpack.c.l.b16 %v124
    %v404 = vunpack.c.h.b16 %v124
    %v405 = vunpack.c.l.b16 %v125
    %v406 = vunpack.c.h.b16 %v125
    %v407 = vunpack.c.l.b16 %v126
    %v408 = vunpack.c.h.b16 %v126
    %v409 = vunpack.c.l.b16 %v127
    %v410 = vunpack.c.h.b16 %v127
    %v411 = vunpack.c.l.b16 %v128
    %v412 = vunpack.c.h.b16 %v128
    %v413 = vunpack.c.l.b16 %v129
    %v414 = vunpack.c.h.b16 %v129
    %v415 = vunpack.c.l.b16 %v130
    %v416 = vunpack.c.h.b16 %v130
    %v417 = vunpack.c.l.b16 %v131
    %v418 = vunpack.c.h.b16 %v131
    %v419 = vunpack.c.l.b16 %v132
    %v420 = vunpack.c.h.b16 %v132
    %v421 = vunpack.c.l.b16 %v133
    %v422 = vunpack.c.h.b16 %v133
    %v423 = vunpack.c.l.b16 %v134
    %v424 = vunpack.c.h.b16 %v134
    %v425 = vunpack.c.l.b16 %v135
    %v426 = vunpack.c.h.b16 %v135
    %v427 = vunpack.c.l.b16 %v136
    %v428 = vunpack.c.h.b16 %v136
    %v429 = vunpack.c.l.b16 %v137
    %v430 = vunpack.c.h.b16 %v137
    %v431 = vunpack.c.l.b16 %v138
    %v432 = vunpack.c.h.b16 %v138
    %v433 = vunpack.c.l.b16 %v139
    %v434 = vunpack.c.h.b16 %v139
    %v435 = vunpack.c.l.b16 %v140
    %v436 = vunpack.c.h.b16 %v140
    %v437 = vunpack.c.l.b16 %v141
    %v438 = vunpack.c.h.b16 %v141
    %v439 = vunpack.c.l.b16 %v142
    %v440 = vunpack.c.h.b16 %v142
    %v441 = vunpack.c.l.b16 %v143
    %v442 = vunpack.c.h.b16 %v143
    %v443 = vunpack.c.l.b16 %v144
    %v444 = vunpack.c.h.b16 %v144
    %v445 = vunpack.c.l.b16 %v145
    %v446 = vunpack.c.h.b16 %v145
    %v447 = vunpack.c.l.b16 %v146
    %v448 = vunpack.c.h.b16 %v146
    %v449 = vunpack.c.l.b16 %v147
    %v450 = vunpack.c.h.b16 %v147
    %v451 = vunpack.c.l.b16 %v148
    %v452 = vunpack.c.h.b16 %v148
    %v453 = vunpack.c.l.b16 %v149
    %v454 = vunpack.c.h.b16 %v149
    %v455 = vunpack.c.l.b16 %v150
    %v456 = vunpack.c.h.b16 %v150
    %v457 = vunpack.c.l.b16 %v151
    %v458 = vunpack.c.h.b16 %v151
    %v459 = vunpack.c.l.b16 %v152
    %v460 = vunpack.c.h.b16 %v152
    %v461 = vunpack.c.l.b16 %v153
    %v462 = vunpack.c.h.b16 %v153
    %v463 = vunpack.c.l.b16 %v154
    %v464 = vunpack.c.h.b16 %v154
    %v465 = vunpack.c.l.b16 %v155
    %v466 = vunpack.c.h.b16 %v155
    %v467 = vunpack.c.l.b16 %v156
    %v468 = vunpack.c.h.b16 %v156
    %v469 = vunpack.c.l.b16 %v157
    %v470 = vunpack.c.h.b16 %v157
    %v471 = vunpack.c.l.b16 %v158
    %v472 = vunpack.c.h.b16 %v158
    %v473 = vunpack.c.l.b16 %v159
    %v474 = vunpack.c.h.b16 %v159
    %v475 = vunpack.c.l.b16 %v160
    %v476 = vunpack.c.h.b16 %v160
    %v477 = vunpack.c.l.b16 %v161
    %v478 = vunpack.c.h.b16 %v161
    %v479 = vunpack.c.l.b16 %v162
    %v480 = vunpack.c.h.b16 %v162
    %v481 = vunpack.c.l.b16 %v163
    %v482 = vunpack.c.h.b16 %v163
    %v483 = vunpack.c.l.b16 %v164
    %v484 = vunpack.c.h.b16 %v164
    %v485 = vunpack.c.l.b16 %v165
    %v486 = vunpack.c.h.b16 %v165
    %v487 = vunpack.c.l.b16 %v166
    %v488 = vunpack.c.h.b16 %v166
    %v489 = vunpack.c.l.b16 %v167
    %v490 = vunpack.c.h.b16 %v167
    %v491 = vunpack.c.l.b16 %v168
    %v492 = vunpack.c.h.b16 %v168
    %v493 = vunpack.c.l.b16 %v169
    %v494 = vunpack.c.h.b16 %v169
    %v495 = vunpack.c.l.b16 %v170
    %v496 = vunpack.c.h.b16 %v170
    %v497 = vunpack.c.l.b16 %v171
    %v498 = vunpack.c.h.b16 %v171
    %v499 = vunpack.c.l.b16 %v172
    %v500 = vunpack.c.h.b16 %v172
    %v501 = vunpack.c.l.b16 %v173
    %v502 = vunpack.c.h.b16 %v173
    %v503 = vunpack.c.l.b16 %v174
    %v504 = vunpack.c.h.b16 %v174
    %v505 = vunpack.c.l.b16 %v175
    %v506 = vunpack.c.h.b16 %v175
    %v507 = vunpack.c.l.b16 %v176
    %v508 = vunpack.c.h.b16 %v176
    %v509 = vunpack.c.l.b16 %v177
    %v510 = vunpack.c.h.b16 %v177
    %v511 = vunpack.c.l.b16 %v178
    %v512 = vunpack.c.h.b16 %v178
    %v513 = vunpack.c.l.b16 %v179
    %v514 = vunpack.c.h.b16 %v179
    %v515 = vunpack.c.l.b16 %v180
    %v516 = vunpack.c.h.b16 %v180
    %v517 = vunpack.c.l.b16 %v181
    %v518 = vunpack.c.h.b16 %v181
    %v519 = vunpack.c.l.b16 %v182
    %v520 = vunpack.c.h.b16 %v182
    %v521 = vunpack.c.l.b16 %v183
    %v522 = vunpack.c.h.b16 %v183
    %v523 = vunpack.c.l.b16 %v184
    %v524 = vunpack.c.h.b16 %v184
    %v525 = vunpack.c.l.b16 %v185
    %v526 = vunpack.c.h.b16 %v185
    %v527 = vunpack.c.l.b16 %v186
    %v528 = vunpack.c.h.b16 %v186
    %v529 = vunpack.c.l.b16 %v187
    %v530 = vunpack.c.h.b16 %v187
    %v531 = vunpack.c.l.b16 %v188
    %v532 = vunpack.c.h.b16 %v188
    %v533 = vunpack.c.l.b16 %v189
    %v534 = vunpack.c.h.b16 %v189
    %v535 = vunpack.c.l.b16 %v190
    %v536 = vunpack.c.h.b16 %v190
    %v537 = vunpack.c.l.b16 %v191
    %v538 = vunpack.c.h.b16 %v191
    %v539 = vunpack.c.l.b16 %v192
    %v540 = vunpack.c.h.b16 %v192
    %v541 = vunpack.c.l.b16 %v193
    %v542 = vunpack.c.h.b16 %v193
    %v543 = vunpack.c.l.b16 %v194
    %v544 = vunpack.c.h.b16 %v194
    %v545 = vunpack.c.l.b16 %v195
    %v546 = vunpack.c.h.b16 %v195
    %v547 = vunpack.c.l.b16 %v196
    %v548 = vunpack.c.h.b16 %v196
    %v549 = vunpack.c.l.b16 %v197
    %v550 = vunpack.c.h.b16 %v197
    %v551 = vunpack.c.l.b16 %v198
    %v552 = vunpack.c.h.b16 %v198
    %v553 = vunpack.c.l.b16 %v199
    %v554 = vunpack.c.h.b16 %v199
    %v555 = vunpack.c.l.b16 %v200
    %v556 = vunpack.c.h.b16 %v200
    %v557 = vunpack.c.l.b16 %v201
    %v558 = vunpack.c.h.b16 %v201
    %v559 = vunpack.c.l.b16 %v202
    %v560 = vunpack.c.h.b16 %v202
    %v561 = vunpack.c.l.b16 %v203
    %v562 = vunpack.c.h.b16 %v203
    %v563 = vunpack.c.l.b16 %v204
    %v564 = vunpack.c.h.b16 %v204
    %v565 = vunpack.c.l.b16 %v205
    %v566 = vunpack.c.h.b16 %v205
    %v567 = vunpack.c.l.b16 %v206
    %v568 = vunpack.c.h.b16 %v206
    %v569 = vunpack.c.l.b16 %v207
    %v570 = vunpack.c.h.b16 %v207
    %v571 = vunpack.c.l.b16 %v208
    %v572 = vunpack.c.h.b16 %v208
    %v573 = vunpack.c.l.b16 %v209
    %v574 = vunpack.c.h.b16 %v209
    %v575 = vunpack.c.l.b16 %v210
    %v576 = vunpack.c.h.b16 %v210
    %v577 = vunpack.c.l.b16 %v211
    %v578 = vunpack.c.h.b16 %v211
    %v579 = vunpack.c.l.b16 %v212
    %v580 = vunpack.c.h.b16 %v212
    %v581 = vunpack.c.l.b16 %v213
    %v582 = vunpack.c.h.b16 %v213
    %v583 = vunpack.c.l.b16 %v214
    %v584 = vunpack.c.h.b16 %v214
    %v585 = vunpack.c.l.b16 %v215
    %v586 = vunpack.c.h.b16 %v215
    %v587 = vunpack.c.l.b16 %v216
    %v588 = vunpack.c.h.b16 %v216
    %v589 = vunpack.c.l.b16 %v217
    %v590 = vunpack.c.h.b16 %v217
    %v591 = vunpack.c.l.b16 %v218
    %v592 = vunpack.c.h.b16 %v218
    %v593 = vunpack.c.l.b16 %v219
    %v594 = vunpack.c.h.b16 %v219
    %v595 = vunpack.c.l.b16 %v220
    %v596 = vunpack.c.h.b16 %v220
    %v597 = vunpack.c.l.b16 %v221
    %v598 = vunpack.c.h.b16 %v221
    %v599 = vunpack.c.l.b16 %v222
    %v600 = vunpack.c.h.b16 %v222
    %v601 = vunpack.c.l.b16 %v223
    %v602 = vunpack.c.h.b16 %v223
    %v603 = vunpack.c.l.b16 %v224
    %v604 = vunpack.c.h.b16 %v224
    %v605 = vunpack.c.l.b16 %v225
    %v606 = vunpack.c.h.b16 %v225
    %v607 = vunpack.c.l.b16 %v226
    %v608 = vunpack.c.h.b16 %v226
    %v609 = vunpack.c.l.b16 %v227
    %v610 = vunpack.c.h.b16 %v227
    %v611 = vunpack.c.l.b16 %v228
    %v612 = vunpack.c.h.b16 %v228
    %v613 = vunpack.c.l.b16 %v229
    %v614 = vunpack.c.h.b16 %v229
    %v615 = vunpack.c.l.b16 %v230
    %v616 = vunpack.c.h.b16 %v230
    %v617 = vunpack.c.l.b16 %v231
    %v618 = vunpack.c.h.b16 %v231
    %v619 = vunpack.c.l.b16 %v232
    %v620 = vunpack.c.h.b16 %v232
    %v621 = vunpack.c.l.b16 %v233
    %v622 = vunpack.c.h.b16 %v233
    %v623 = vunpack.c.l.b16 %v234
    %v624 = vunpack.c.h.b16 %v234
    %v625 = vpack.c.b16 %v371, %v369
    %v626 = vpack.c.b16 %v372, %v370
    %v627 = vpack.c.b16 %v375, %v373
    %v628 = vpack.c.b16 %v376, %v374
    %v629 = vpack.c.b16 %v379, %v377
    %v630 = vpack.c.b16 %v380, %v378
    %v631 = vpack.c.b16 %v383, %v381
    %v632 = vpack.c.b16 %v384, %v382
    %v633 = vpack.c.b16 %v387, %v385
    %v634 = vpack.c.b16 %v388, %v386
    %v635 = vpack.c.b16 %v391, %v389
    %v636 = vpack.c.b16 %v392, %v390
    %v637 = vpack.c.b16 %v395, %v393
    %v638 = vpack.c.b16 %v396, %v394
    %v639 = vpack.c.b16 %v399, %v397
    %v640 = vpack.c.b16 %v400, %v398
    %v641 = vpack.c.b16 %v403, %v401
    %v642 = vpack.c.b16 %v404, %v402
    %v643 = vpack.c.b16 %v407, %v405
    %v644 = vpack.c.b16 %v408, %v406
    %v645 = vpack.c.b16 %v411, %v409
    %v646 = vpack.c.b16 %v412, %v410
    %v647 = vpack.c.b16 %v415, %v413
    %v648 = vpack.c.b16 %v416, %v414
    %v649 = vpack.c.b16 %v419, %v417
    %v650 = vpack.c.b16 %v420, %v418
    %v651 = vpack.c.b16 %v423, %v421
    %v652 = vpack.c.b16 %v424, %v422
    %v653 = vpack.c.b16 %v427, %v425
    %v654 = vpack.c.b16 %v428, %v426
    %v655 = vpack.c.b16 %v431, %v429
    %v656 = vpack.c.b16 %v432, %v430
    %v657 = vpack.c.b16 %v435, %v433
    %v658 = vpack.c.b16 %v436, %v434
    %v659 = vpack.c.b16 %v439, %v437
    %v660 = vpack.c.b16 %v440, %v438
    %v661 = vpack.c.b16 %v443, %v441
    %v662 = vpack.c.b16 %v444, %v442
    %v663 = vpack.c.b16 %v447, %v445
    %v664 = vpack.c.b16 %v448, %v446
    %v665 = vpack.c.b16 %v451, %v449
    %v666 = vpack.c.b16 %v452, %v450
    %v667 = vpack.c.b16 %v455, %v453
    %v668 = vpack.c.b16 %v456, %v454
    %v669 = vpack.c.b16 %v459, %v457
    %v670 = vpack.c.b16 %v460, %v458
    %v671 = vpack.c.b16 %v463, %v461
    %v672 = vpack.c.b16 %v464, %v462
    %v673 = vpack.c.b16 %v467, %v465
    %v674 = vpack.c.b16 %v468, %v466
    %v675 = vpack.c.b16 %v471, %v469
    %v676 = vpack.c.b16 %v472, %v470
    %v677 = vpack.c.b16 %v475, %v473
    %v678 = vpack.c.b16 %v476, %v474
    %v679 = vpack.c.b16 %v479, %v477
    %v680 = vpack.c.b16 %v480, %v478
    %v681 = vpack.c.b16 %v483, %v481
    %v682 = vpack.c.b16 %v484, %v482
    %v683 = vpack.c.b16 %v487, %v485
    %v684 = vpack.c.b16 %v488, %v486
    %v685 = vpack.c.b16 %v491, %v489
    %v686 = vpack.c.b16 %v492, %v490
    %v687 = vpack.c.b16 %v495, %v493
    %v688 = vpack.c.b16 %v496, %v494
    %v689 = vpack.c.b16 %v499, %v497
    %v690 = vpack.c.b16 %v500, %v498
    %v691 = vpack.c.b16 %v503, %v501
    %v692 = vpack.c.b16 %v504, %v502
    %v693 = vpack.c.b16 %v507, %v505
    %v694 = vpack.c.b16 %v508, %v506
    %v695 = vpack.c.b16 %v511, %v509
    %v696 = vpack.c.b16 %v512, %v510
    %v697 = vpack.c.b16 %v515, %v513
    %v698 = vpack.c.b16 %v516, %v514
    %v699 = vpack.c.b16 %v519, %v517
    %v700 = vpack.c.b16 %v520, %v518
    %v701 = vpack.c.b16 %v523, %v521
    %v702 = vpack.c.b16 %v524, %v522
    %v703 = vpack.c.b16 %v527, %v525
    %v704 = vpack.c.b16 %v528, %v526
    %v705 = vpack.c.b16 %v531, %v529
    %v706 = vpack.c.b16 %v532, %v530
    %v707 = vpack.c.b16 %v535, %v533
    %v708 = vpack.c.b16 %v536, %v534
    %v709 = vpack.c.b16 %v539, %v537
    %v710 = vpack.c.b16 %v540, %v538
    %v711 = vpack.c.b16 %v543, %v541
    %v712 = vpack.c.b16 %v544, %v542
    %v713 = vpack.c.b16 %v547, %v545
    %v714 = vpack.c.b16 %v548, %v546
    %v715 = vpack.c.b16 %v551, %v549
    %v716 = vpack.c.b16 %v552, %v550
    %v717 = vpack.c.b16 %v555, %v553
    %v718 = vpack.c.b16 %v556, %v554
    %v719 = vpack.c.b16 %v559, %v557
    %v720 = vpack.c.b16 %v560, %v558
    %v721 = vpack.c.b16 %v563, %v561
    %v722 = vpack.c.b16 %v564, %v562
    %v723 = vpack.c.b16 %v567, %v565
    %v724 = vpack.c.b16 %v568, %v566
    %v725 = vpack.c.b16 %v571, %v569
    %v726 = vpack.c.b16 %v572, %v570
    %v727 = vpack.c.b16 %v575, %v573
    %v728 = vpack.c.b16 %v576, %v574
    %v729 = vpack.c.b16 %v579, %v577
    %v730 = vpack.c.b16 %v580, %v578
    %v731 = vpack.c.b16 %v583, %v581
    %v732 = vpack.c.b16 %v584, %v582
    %v733 = vpack.c.b16 %v587, %v585
    %v734 = vpack.c.b16 %v588, %v586
    %v735 = vpack.c.b16 %v591, %v589
    %v736 = vpack.c.b16 %v592, %v590
    %v737 = vpack.c.b16 %v595, %v593
    %v738 = vpack.c.b16 %v596, %v594
    %v739 = vpack.c.b16 %v599, %v597
    %v740 = vpack.c.b16 %v600, %v598
    %v741 = vpack.c.b16 %v603, %v601
    %v742 = vpack.c.b16 %v604, %v602
    %v743 = vpack.c.b16 %v607, %v605
    %v744 = vpack.c.b16 %v608, %v606
    %v745 = vpack.c.b16 %v611, %v609
    %v746 = vpack.c.b16 %v612, %v610
    %v747 = vpack.c.b16 %v615, %v613
    %v748 = vpack.c.b16 %v616, %v614
    %v749 = vpack.c.b16 %v619, %v617
    %v750 = vpack.c.b16 %v620, %v618
    %v751 = vpack.c.b16 %v623, %v621
    %v752 = vpack.c.b16 %v624, %v622
    %881 = vmatpush.bf16.msra.mxu0 %v639
    %882 = vmatpush.bf16.msra.mxu0 %v637
    %883 = vmatpush.bf16.msra.mxu0 %v635
    %884 = vmatpush.bf16.msra.mxu0 %v633
    %885 = vmatpush.bf16.msra.mxu0 %v631
    %886 = vmatpush.bf16.msra.mxu0 %v629
    %887 = vmatpush.bf16.msra.mxu0 %v627
    %888 = vmatpush.bf16.msra.mxu0 %v625
    %889 = vmatmul.bf16.gmra.mxu0 %v99
    %v890 = vpop.f32.mrf.mxu0
    %v891 = vadd.f32 %v237, %v890
    %v892 = vpop.f32.mrf.mxu0
    %893 = vdwg.mxu0
    %894 = vmatpush.bf16.msra.mxu0 %v655
    %895 = vmatpush.bf16.msra.mxu0 %v653
    %896 = vmatpush.bf16.msra.mxu0 %v651
    %897 = vmatpush.bf16.msra.mxu0 %v649
    %898 = vmatpush.bf16.msra.mxu0 %v647
    %899 = vmatpush.bf16.msra.mxu0 %v645
    %900 = vmatpush.bf16.msra.mxu0 %v643
    %901 = vmatpush.bf16.msra.mxu0 %v641
    %902 = vmatmul.bf16.gmra.mxu0 %v100
    %v903 = vpop.f32.mrf.mxu0
    %v904 = vadd.f32 %v891, %v903
    %v905 = vpop.f32.mrf.mxu0
    %906 = vdwg.mxu0
    %907 = vmatpush.bf16.msra.mxu0 %v671
    %908 = vmatpush.bf16.msra.mxu0 %v669
    %909 = vmatpush.bf16.msra.mxu0 %v667
    %910 = vmatpush.bf16.msra.mxu0 %v665
    %911 = vmatpush.bf16.msra.mxu0 %v663
    %912 = vmatpush.bf16.msra.mxu0 %v661
    %913 = vmatpush.bf16.msra.mxu0 %v659
    %914 = vmatpush.bf16.msra.mxu0 %v657
    %915 = vmatmul.bf16.gmra.mxu0 %v101
    %v916 = vpop.f32.mrf.mxu0
    %v917 = vadd.f32 %v904, %v916
    %v918 = vpop.f32.mrf.mxu0
    %919 = vdwg.mxu0
    %920 = vmatpush.bf16.msra.mxu0 %v687
    %921 = vmatpush.bf16.msra.mxu0 %v685
    %922 = vmatpush.bf16.msra.mxu0 %v683
    %923 = vmatpush.bf16.msra.mxu0 %v681
    %924 = vmatpush.bf16.msra.mxu0 %v679
    %925 = vmatpush.bf16.msra.mxu0 %v677
    %926 = vmatpush.bf16.msra.mxu0 %v675
    %927 = vmatpush.bf16.msra.mxu0 %v673
    %928 = vmatmul.bf16.gmra.mxu0 %v102
    %v929 = vpop.f32.mrf.mxu0
    %v930 = vadd.f32 %v917, %v929
    %v931 = vpop.f32.mrf.mxu0
    %932 = vdwg.mxu0
    %933 = vmatpush.bf16.msra.mxu0 %v703
    %934 = vmatpush.bf16.msra.mxu0 %v701
    %935 = vmatpush.bf16.msra.mxu0 %v699
    %936 = vmatpush.bf16.msra.mxu0 %v697
    %937 = vmatpush.bf16.msra.mxu0 %v695
    %938 = vmatpush.bf16.msra.mxu0 %v693
    %939 = vmatpush.bf16.msra.mxu0 %v691
    %940 = vmatpush.bf16.msra.mxu0 %v689
    %941 = vmatmul.bf16.gmra.mxu0 %v103
    %v942 = vpop.f32.mrf.mxu0
    %v943 = vadd.f32 %v930, %v942
    %v944 = vpop.f32.mrf.mxu0
    %945 = vdwg.mxu0
    %946 = vmatpush.bf16.msra.mxu0 %v719
    %947 = vmatpush.bf16.msra.mxu0 %v717
    %948 = vmatpush.bf16.msra.mxu0 %v715
    %949 = vmatpush.bf16.msra.mxu0 %v713
    %950 = vmatpush.bf16.msra.mxu0 %v711
    %951 = vmatpush.bf16.msra.mxu0 %v709
    %952 = vmatpush.bf16.msra.mxu0 %v707
    %953 = vmatpush.bf16.msra.mxu0 %v705
    %954 = vmatmul.bf16.gmra.mxu0 %v104
    %v955 = vpop.f32.mrf.mxu0
    %v956 = vadd.f32 %v943, %v955
    %v957 = vpop.f32.mrf.mxu0
    %958 = vdwg.mxu0
    %959 = vmatpush.bf16.msra.mxu0 %v735
    %960 = vmatpush.bf16.msra.mxu0 %v733
    %961 = vmatpush.bf16.msra.mxu0 %v731
    %962 = vmatpush.bf16.msra.mxu0 %v729
    %963 = vmatpush.bf16.msra.mxu0 %v727
    %964 = vmatpush.bf16.msra.mxu0 %v725
    %965 = vmatpush.bf16.msra.mxu0 %v723
    %966 = vmatpush.bf16.msra.mxu0 %v721
    %967 = vmatmul.bf16.gmra.mxu0 %v105
    %v968 = vpop.f32.mrf.mxu0
    %v969 = vadd.f32 %v956, %v968
    %v970 = vpop.f32.mrf.mxu0
    %971 = vdwg.mxu0
    %972 = vmatpush.bf16.msra.mxu0 %v751
    %973 = vmatpush.bf16.msra.mxu0 %v749
    %974 = vmatpush.bf16.msra.mxu0 %v747
    %975 = vmatpush.bf16.msra.mxu0 %v745
    %976 = vmatpush.bf16.msra.mxu0 %v743
    %977 = vmatpush.bf16.msra.mxu0 %v741
    %978 = vmatpush.bf16.msra.mxu0 %v739
    %979 = vmatpush.bf16.msra.mxu0 %v737
    %980 = vmatmul.bf16.gmra.mxu0 %v106
    %v981 = vpop.f32.mrf.mxu0
    %v982 = vadd.f32 %v969, %v981
    %v983 = vpop.f32.mrf.mxu0
    %984 = vdwg.mxu0
    %985 = vmatpush.bf16.msra.mxu0 %v640
    %986 = vmatpush.bf16.msra.mxu0 %v638
    %987 = vmatpush.bf16.msra.mxu0 %v636
    %988 = vmatpush.bf16.msra.mxu0 %v634
    %989 = vmatpush.bf16.msra.mxu0 %v632
    %990 = vmatpush.bf16.msra.mxu0 %v630
    %991 = vmatpush.bf16.msra.mxu0 %v628
    %992 = vmatpush.bf16.msra.mxu0 %v626
    %993 = vmatmul.bf16.gmra.mxu0 %v99
    %v994 = vpop.f32.mrf.mxu0
    %v995 = vadd.f32 %v238, %v994
    %v996 = vpop.f32.mrf.mxu0
    %997 = vdwg.mxu0
    %998 = vmatpush.bf16.msra.mxu0 %v656
    %999 = vmatpush.bf16.msra.mxu0 %v654
    %1000 = vmatpush.bf16.msra.mxu0 %v652
    %1001 = vmatpush.bf16.msra.mxu0 %v650
    %1002 = vmatpush.bf16.msra.mxu0 %v648
    %1003 = vmatpush.bf16.msra.mxu0 %v646
    %1004 = vmatpush.bf16.msra.mxu0 %v644
    %1005 = vmatpush.bf16.msra.mxu0 %v642
    %1006 = vmatmul.bf16.gmra.mxu0 %v100
    %v1007 = vpop.f32.mrf.mxu0
    %v1008 = vadd.f32 %v995, %v1007
    %v1009 = vpop.f32.mrf.mxu0
    %1010 = vdwg.mxu0
    %1011 = vmatpush.bf16.msra.mxu0 %v672
    %1012 = vmatpush.bf16.msra.mxu0 %v670
    %1013 = vmatpush.bf16.msra.mxu0 %v668
    %1014 = vmatpush.bf16.msra.mxu0 %v666
    %1015 = vmatpush.bf16.msra.mxu0 %v664
    %1016 = vmatpush.bf16.msra.mxu0 %v662
    %1017 = vmatpush.bf16.msra.mxu0 %v660
    %1018 = vmatpush.bf16.msra.mxu0 %v658
    %1019 = vmatmul.bf16.gmra.mxu0 %v101
    %v1020 = vpop.f32.mrf.mxu0
    %v1021 = vadd.f32 %v1008, %v1020
    %v1022 = vpop.f32.mrf.mxu0
    %1023 = vdwg.mxu0
    %1024 = vmatpush.bf16.msra.mxu0 %v688
    %1025 = vmatpush.bf16.msra.mxu0 %v686
    %1026 = vmatpush.bf16.msra.mxu0 %v684
    %1027 = vmatpush.bf16.msra.mxu0 %v682
    %1028 = vmatpush.bf16.msra.mxu0 %v680
    %1029 = vmatpush.bf16.msra.mxu0 %v678
    %1030 = vmatpush.bf16.msra.mxu0 %v676
    %1031 = vmatpush.bf16.msra.mxu0 %v674
    %1032 = vmatmul.bf16.gmra.mxu0 %v102
    %v1033 = vpop.f32.mrf.mxu0
    %v1034 = vadd.f32 %v1021, %v1033
    %v1035 = vpop.f32.mrf.mxu0
    %1036 = vdwg.mxu0
    %1037 = vmatpush.bf16.msra.mxu0 %v704
    %1038 = vmatpush.bf16.msra.mxu0 %v702
    %1039 = vmatpush.bf16.msra.mxu0 %v700
    %1040 = vmatpush.bf16.msra.mxu0 %v698
    %1041 = vmatpush.bf16.msra.mxu0 %v696
    %1042 = vmatpush.bf16.msra.mxu0 %v694
    %1043 = vmatpush.bf16.msra.mxu0 %v692
    %1044 = vmatpush.bf16.msra.mxu0 %v690
    %1045 = vmatmul.bf16.gmra.mxu0 %v103
    %v1046 = vpop.f32.mrf.mxu0
    %v1047 = vadd.f32 %v1034, %v1046
    %v1048 = vpop.f32.mrf.mxu0
    %1049 = vdwg.mxu0
    %1050 = vmatpush.bf16.msra.mxu0 %v720
    %1051 = vmatpush.bf16.msra.mxu0 %v718
    %1052 = vmatpush.bf16.msra.mxu0 %v716
    %1053 = vmatpush.bf16.msra.mxu0 %v714
    %1054 = vmatpush.bf16.msra.mxu0 %v712
    %1055 = vmatpush.bf16.msra.mxu0 %v710
    %1056 = vmatpush.bf16.msra.mxu0 %v708
    %1057 = vmatpush.bf16.msra.mxu0 %v706
    %1058 = vmatmul.bf16.gmra.mxu0 %v104
    %v1059 = vpop.f32.mrf.mxu0
    %v1060 = vadd.f32 %v1047, %v1059
    %v1061 = vpop.f32.mrf.mxu0
    %1062 = vdwg.mxu0
    %1063 = vmatpush.bf16.msra.mxu0 %v736
    %1064 = vmatpush.bf16.msra.mxu0 %v734
    %1065 = vmatpush.bf16.msra.mxu0 %v732
    %1066 = vmatpush.bf16.msra.mxu0 %v730
    %1067 = vmatpush.bf16.msra.mxu0 %v728
    %1068 = vmatpush.bf16.msra.mxu0 %v726
    %1069 = vmatpush.bf16.msra.mxu0 %v724
    %1070 = vmatpush.bf16.msra.mxu0 %v722
    %1071 = vmatmul.bf16.gmra.mxu0 %v105
    %v1072 = vpop.f32.mrf.mxu0
    %v1073 = vadd.f32 %v1060, %v1072
    %v1074 = vpop.f32.mrf.mxu0
    %1075 = vdwg.mxu0
    %1076 = vmatpush.bf16.msra.mxu0 %v752
    %1077 = vmatpush.bf16.msra.mxu0 %v750
    %1078 = vmatpush.bf16.msra.mxu0 %v748
    %1079 = vmatpush.bf16.msra.mxu0 %v746
    %1080 = vmatpush.bf16.msra.mxu0 %v744
    %1081 = vmatpush.bf16.msra.mxu0 %v742
    %1082 = vmatpush.bf16.msra.mxu0 %v740
    %1083 = vmatpush.bf16.msra.mxu0 %v738
    %1084 = vmatmul.bf16.gmra.mxu0 %v106
    %v1085 = vpop.f32.mrf.mxu0
    %v1086 = vadd.f32 %v1073, %v1085
    %v1087 = vpop.f32.mrf.mxu0
    %1088 = vdwg.mxu0
    %v1089 = vmul.f32 %v982, 0.5
    %v1090 = vmul.f32 %v1086, 0.5
    %v1091 = vmul.f32 %v982, 0.70710677
    %v1092 = vmul.f32 %v1086, 0.70710677
    %v1093 = vmul.f32 %v1091, %v1091
    %v1094 = vmin.f32 16.0, %v1093
    %v1095 = vmul.f32 %v1094, 2.1237322e-06
    %v1096 = vadd.f32 %v1095, 0.00028619796
    %v1097 = vmul.f32 %v1094, %v1096
    %v1098 = vadd.f32 %v1097, 0.0036580483
    %v1099 = vmul.f32 %v1094, %v1098
    %v1100 = vadd.f32 %v1099, 0.05243302
    %v1101 = vmul.f32 %v1094, %v1100
    %v1102 = vadd.f32 %v1101, 0.18741608
    %v1103 = vmul.f32 %v1094, %v1102
    %v1104 = vadd.f32 %v1103, 1.1283791
    %v1105 = vmul.f32 %v1091, %v1104
    %v1106 = vmul.f32 %v1094, 3.8918573e-05
    %v1107 = vadd.f32 %v1106, 0.001143296
    %v1108 = vmul.f32 %v1094, %v1107
    %v1109 = vadd.f32 %v1108, 0.014752088
    %v1110 = vmul.f32 %v1094, %v1109
    %v1111 = vadd.f32 %v1110, 0.112945676
    %v1112 = vmul.f32 %v1094, %v1111
    %v1113 = vadd.f32 %v1112, 0.4994258
    %v1114 = vmul.f32 %v1094, %v1113
    %v1115 = vadd.f32 %v1114, 1.0
    %v1116 = vrcp.pop %v1115
    %v1117 = vmul.f32 %v1115, %v1116
    %v1118 = vsub.f32 1.0, %v1117
    %v1119 = vmul.f32 %v1116, %v1118
    %v1120 = vadd.f32 %v1116, %v1119
    %vm1121 = vweird.f32 %v1115
    %vm1122 = vweird.f32 %v1116
    %vm1123 = vmor %vm1121, %vm1122
    %v1124 = vsel %vm1123, %v1116, %v1120
    %v1125 = vand.u32 2147483647, %v1115
    %vm1126 = vcmp.eq.f32.partialorder %v1125, 8.507059e+37
    %v1127 = vand.u32 %v1115, 2147483648
    %v1128 = vor.u32 1.1754944e-38, %v1127
    %v1129 = vsel %vm1126, %v1128, %v1124
    %v1130 = vmul.f32 %v1105, %v1129
    %v1131 = vmin.f32 %v1130, 1.0
    %v1132 = vmax.f32 %v1131, -1.0
    %v1133 = vmul.f32 %v1092, %v1092
    %v1134 = vmin.f32 16.0, %v1133
    %v1135 = vmul.f32 %v1134, 2.1237322e-06
    %v1136 = vadd.f32 %v1135, 0.00028619796
    %v1137 = vmul.f32 %v1134, %v1136
    %v1138 = vadd.f32 %v1137, 0.0036580483
    %v1139 = vmul.f32 %v1134, %v1138
    %v1140 = vadd.f32 %v1139, 0.05243302
    %v1141 = vmul.f32 %v1134, %v1140
    %v1142 = vadd.f32 %v1141, 0.18741608
    %v1143 = vmul.f32 %v1134, %v1142
    %v1144 = vadd.f32 %v1143, 1.1283791
    %v1145 = vmul.f32 %v1092, %v1144
    %v1146 = vmul.f32 %v1134, 3.8918573e-05
    %v1147 = vadd.f32 %v1146, 0.001143296
    %v1148 = vmul.f32 %v1134, %v1147
    %v1149 = vadd.f32 %v1148, 0.014752088
    %v1150 = vmul.f32 %v1134, %v1149
    %v1151 = vadd.f32 %v1150, 0.112945676
    %v1152 = vmul.f32 %v1134, %v1151
    %v1153 = vadd.f32 %v1152, 0.4994258
    %v1154 = vmul.f32 %v1134, %v1153
    %v1155 = vadd.f32 %v1154, 1.0
    %v1156 = vrcp.pop %v1155
    %v1157 = vmul.f32 %v1155, %v1156
    %v1158 = vsub.f32 1.0, %v1157
    %v1159 = vmul.f32 %v1156, %v1158
    %v1160 = vadd.f32 %v1156, %v1159
    %vm1161 = vweird.f32 %v1155
    %vm1162 = vweird.f32 %v1156
    %vm1163 = vmor %vm1161, %vm1162
    %v1164 = vsel %vm1163, %v1156, %v1160
    %v1165 = vand.u32 2147483647, %v1155
    %vm1166 = vcmp.eq.f32.partialorder %v1165, 8.507059e+37
    %v1167 = vand.u32 %v1155, 2147483648
    %v1168 = vor.u32 1.1754944e-38, %v1167
    %v1169 = vsel %vm1166, %v1168, %v1164
    %v1170 = vmul.f32 %v1145, %v1169
    %v1171 = vmin.f32 %v1170, 1.0
    %v1172 = vmax.f32 %v1171, -1.0
    %v1173 = vadd.f32 %v1132, 1.0
    %v1174 = vadd.f32 %v1172, 1.0
    %v1175 = vmul.f32 %v1089, %v1173
    %v1176 = vmul.f32 %v1090, %v1174
    %v1177 = vmul.f32 %v1175, %v1175
    %v1178 = vmul.f32 %v1176, %v1176
    %v1179 = vadd.f32 %v1177, %v1178
    %1180 = vadd.xlane.f32.xlu0 %v1179
    %v1181 = vpop.xlane.xlu0 %1180
    %v1182 = vmax.f32 %v1181, 1e-12
    %v1183 = vrsqrt.pop %v1182
    %v1184 = vmul.f32 %v1183, %v1182
    %v1185 = vmul.f32 %v1184, %v1183
    %v1186 = vmul.f32 0.5, %v1185
    %v1187 = vsub.f32 1.5, %v1186
    %v1188 = vmul.f32 %v1183, %v1187
    %vm1189 = vweird.f32 %v1182
    %vm1190 = vweird.f32 %v1183
    %vm1191 = vmor %vm1189, %vm1190
    %v1192 = vsel %vm1191, %v1183, %v1188
    %v1193 = vmul.f32 %v1175, %v1192
    %v1194 = vmul.f32 %v1176, %v1192
    %v1195 = vpack.c.bf16 %v1193, %v1193
    %v1196 = vpack.c.bf16 %v1194, %v1194
    %v1197 = vld [vmem:[#allocation4] sm:$0xff]
    %v1198 = vld [vmem:[#allocation4 + $0x8] sm:$0xff]
    %v1199 = vld [vmem:[#allocation4 + $0x10] sm:$0xff]
    %v1200 = vld [vmem:[#allocation4 + $0x18] sm:$0xff]
    %v1201 = vld [vmem:[#allocation4 + $0x20] sm:$0xff]
    %v1202 = vld [vmem:[#allocation4 + $0x28] sm:$0xff]
    %v1203 = vld [vmem:[#allocation4 + $0x30] sm:$0xff]
    %v1204 = vld [vmem:[#allocation4 + $0x38] sm:$0xff]
    %v1205 = vld [vmem:[#allocation4 + $0x40] sm:$0xff]
    %v1206 = vld [vmem:[#allocation4 + $0x48] sm:$0xff]
    %v1207 = vld [vmem:[#allocation4 + $0x50] sm:$0xff]
    %v1208 = vld [vmem:[#allocation4 + $0x58] sm:$0xff]
    %v1209 = vld [vmem:[#allocation4 + $0x60] sm:$0xff]
    %v1210 = vld [vmem:[#allocation4 + $0x68] sm:$0xff]
    %v1211 = vld [vmem:[#allocation4 + $0x70] sm:$0xff]
    %v1212 = vld [vmem:[#allocation4 + $0x78] sm:$0xff]
    %v1213 = vld [vmem:[#allocation4 + $0x80] sm:$0xff]
    %v1214 = vld [vmem:[#allocation4 + $0x88] sm:$0xff]
    %v1215 = vld [vmem:[#allocation4 + $0x90] sm:$0xff]
    %v1216 = vld [vmem:[#allocation4 + $0x98] sm:$0xff]
    %v1217 = vld [vmem:[#allocation4 + $0xa0] sm:$0xff]
    %v1218 = vld [vmem:[#allocation4 + $0xa8] sm:$0xff]
    %v1219 = vld [vmem:[#allocation4 + $0xb0] sm:$0xff]
    %v1220 = vld [vmem:[#allocation4 + $0xb8] sm:$0xff]
    %v1221 = vld [vmem:[#allocation4 + $0xc0] sm:$0xff]
    %v1222 = vld [vmem:[#allocation4 + $0xc8] sm:$0xff]
    %v1223 = vld [vmem:[#allocation4 + $0xd0] sm:$0xff]
    %v1224 = vld [vmem:[#allocation4 + $0xd8] sm:$0xff]
    %v1225 = vld [vmem:[#allocation4 + $0xe0] sm:$0xff]
    %v1226 = vld [vmem:[#allocation4 + $0xe8] sm:$0xff]
    %v1227 = vld [vmem:[#allocation4 + $0xf0] sm:$0xff]
    %v1228 = vld [vmem:[#allocation4 + $0xf8] sm:$0xff]
    %v1229 = vld [vmem:[#allocation4 + $0x100] sm:$0xff]
    %v1230 = vld [vmem:[#allocation4 + $0x108] sm:$0xff]
    %v1231 = vld [vmem:[#allocation4 + $0x110] sm:$0xff]
    %v1232 = vld [vmem:[#allocation4 + $0x118] sm:$0xff]
    %v1233 = vld [vmem:[#allocation4 + $0x120] sm:$0xff]
    %v1234 = vld [vmem:[#allocation4 + $0x128] sm:$0xff]
    %v1235 = vld [vmem:[#allocation4 + $0x130] sm:$0xff]
    %v1236 = vld [vmem:[#allocation4 + $0x138] sm:$0xff]
    %v1237 = vld [vmem:[#allocation4 + $0x140] sm:$0xff]
    %v1238 = vld [vmem:[#allocation4 + $0x148] sm:$0xff]
    %v1239 = vld [vmem:[#allocation4 + $0x150] sm:$0xff]
    %v1240 = vld [vmem:[#allocation4 + $0x158] sm:$0xff]
    %v1241 = vld [vmem:[#allocation4 + $0x160] sm:$0xff]
    %v1242 = vld [vmem:[#allocation4 + $0x168] sm:$0xff]
    %v1243 = vld [vmem:[#allocation4 + $0x170] sm:$0xff]
    %v1244 = vld [vmem:[#allocation4 + $0x178] sm:$0xff]
    %v1245 = vld [vmem:[#allocation4 + $0x180] sm:$0xff]
    %v1246 = vld [vmem:[#allocation4 + $0x188] sm:$0xff]
    %v1247 = vld [vmem:[#allocation4 + $0x190] sm:$0xff]
    %v1248 = vld [vmem:[#allocation4 + $0x198] sm:$0xff]
    %v1249 = vld [vmem:[#allocation4 + $0x1a0] sm:$0xff]
    %v1250 = vld [vmem:[#allocation4 + $0x1a8] sm:$0xff]
    %v1251 = vld [vmem:[#allocation4 + $0x1b0] sm:$0xff]
    %v1252 = vld [vmem:[#allocation4 + $0x1b8] sm:$0xff]
    %v1253 = vld [vmem:[#allocation4 + $0x1c0] sm:$0xff]
    %v1254 = vld [vmem:[#allocation4 + $0x1c8] sm:$0xff]
    %v1255 = vld [vmem:[#allocation4 + $0x1d0] sm:$0xff]
    %v1256 = vld [vmem:[#allocation4 + $0x1d8] sm:$0xff]
    %v1257 = vld [vmem:[#allocation4 + $0x1e0] sm:$0xff]
    %v1258 = vld [vmem:[#allocation4 + $0x1e8] sm:$0xff]
    %v1259 = vld [vmem:[#allocation4 + $0x1f0] sm:$0xff]
    %v1260 = vld [vmem:[#allocation4 + $0x1f8] sm:$0xff]
    %v1261 = vld [vmem:[#allocation4 + $0x200] sm:$0xff]
    %v1262 = vld [vmem:[#allocation4 + $0x208] sm:$0xff]
    %v1263 = vld [vmem:[#allocation4 + $0x210] sm:$0xff]
    %v1264 = vld [vmem:[#allocation4 + $0x218] sm:$0xff]
    %v1265 = vld [vmem:[#allocation4 + $0x220] sm:$0xff]
    %v1266 = vld [vmem:[#allocation4 + $0x228] sm:$0xff]
    %v1267 = vld [vmem:[#allocation4 + $0x230] sm:$0xff]
    %v1268 = vld [vmem:[#allocation4 + $0x238] sm:$0xff]
    %v1269 = vld [vmem:[#allocation4 + $0x240] sm:$0xff]
    %v1270 = vld [vmem:[#allocation4 + $0x248] sm:$0xff]
    %v1271 = vld [vmem:[#allocation4 + $0x250] sm:$0xff]
    %v1272 = vld [vmem:[#allocation4 + $0x258] sm:$0xff]
    %v1273 = vld [vmem:[#allocation4 + $0x260] sm:$0xff]
    %v1274 = vld [vmem:[#allocation4 + $0x268] sm:$0xff]
    %v1275 = vld [vmem:[#allocation4 + $0x270] sm:$0xff]
    %v1276 = vld [vmem:[#allocation4 + $0x278] sm:$0xff]
    %v1277 = vld [vmem:[#allocation4 + $0x280] sm:$0xff]
    %v1278 = vld [vmem:[#allocation4 + $0x288] sm:$0xff]
    %v1279 = vld [vmem:[#allocation4 + $0x290] sm:$0xff]
    %v1280 = vld [vmem:[#allocation4 + $0x298] sm:$0xff]
    %v1281 = vld [vmem:[#allocation4 + $0x2a0] sm:$0xff]
    %v1282 = vld [vmem:[#allocation4 + $0x2a8] sm:$0xff]
    %v1283 = vld [vmem:[#allocation4 + $0x2b0] sm:$0xff]
    %v1284 = vld [vmem:[#allocation4 + $0x2b8] sm:$0xff]
    %v1285 = vld [vmem:[#allocation4 + $0x2c0] sm:$0xff]
    %v1286 = vld [vmem:[#allocation4 + $0x2c8] sm:$0xff]
    %v1287 = vld [vmem:[#allocation4 + $0x2d0] sm:$0xff]
    %v1288 = vld [vmem:[#allocation4 + $0x2d8] sm:$0xff]
    %v1289 = vld [vmem:[#allocation4 + $0x2e0] sm:$0xff]
    %v1290 = vld [vmem:[#allocation4 + $0x2e8] sm:$0xff]
    %v1291 = vld [vmem:[#allocation4 + $0x2f0] sm:$0xff]
    %v1292 = vld [vmem:[#allocation4 + $0x2f8] sm:$0xff]
    %v1293 = vld [vmem:[#allocation4 + $0x300] sm:$0xff]
    %v1294 = vld [vmem:[#allocation4 + $0x308] sm:$0xff]
    %v1295 = vld [vmem:[#allocation4 + $0x310] sm:$0xff]
    %v1296 = vld [vmem:[#allocation4 + $0x318] sm:$0xff]
    %v1297 = vld [vmem:[#allocation4 + $0x320] sm:$0xff]
    %v1298 = vld [vmem:[#allocation4 + $0x328] sm:$0xff]
    %v1299 = vld [vmem:[#allocation4 + $0x330] sm:$0xff]
    %v1300 = vld [vmem:[#allocation4 + $0x338] sm:$0xff]
    %v1301 = vld [vmem:[#allocation4 + $0x340] sm:$0xff]
    %v1302 = vld [vmem:[#allocation4 + $0x348] sm:$0xff]
    %v1303 = vld [vmem:[#allocation4 + $0x350] sm:$0xff]
    %v1304 = vld [vmem:[#allocation4 + $0x358] sm:$0xff]
    %v1305 = vld [vmem:[#allocation4 + $0x360] sm:$0xff]
    %v1306 = vld [vmem:[#allocation4 + $0x368] sm:$0xff]
    %v1307 = vld [vmem:[#allocation4 + $0x370] sm:$0xff]
    %v1308 = vld [vmem:[#allocation4 + $0x378] sm:$0xff]
    %v1309 = vld [vmem:[#allocation4 + $0x380] sm:$0xff]
    %v1310 = vld [vmem:[#allocation4 + $0x388] sm:$0xff]
    %v1311 = vld [vmem:[#allocation4 + $0x390] sm:$0xff]
    %v1312 = vld [vmem:[#allocation4 + $0x398] sm:$0xff]
    %v1313 = vld [vmem:[#allocation4 + $0x3a0] sm:$0xff]
    %v1314 = vld [vmem:[#allocation4 + $0x3a8] sm:$0xff]
    %v1315 = vld [vmem:[#allocation4 + $0x3b0] sm:$0xff]
    %v1316 = vld [vmem:[#allocation4 + $0x3b8] sm:$0xff]
    %v1317 = vld [vmem:[#allocation4 + $0x3c0] sm:$0xff]
    %v1318 = vld [vmem:[#allocation4 + $0x3c8] sm:$0xff]
    %v1319 = vld [vmem:[#allocation4 + $0x3d0] sm:$0xff]
    %v1320 = vld [vmem:[#allocation4 + $0x3d8] sm:$0xff]
    %v1321 = vld [vmem:[#allocation4 + $0x3e0] sm:$0xff]
    %v1322 = vld [vmem:[#allocation4 + $0x3e8] sm:$0xff]
    %v1323 = vld [vmem:[#allocation4 + $0x3f0] sm:$0xff]
    %v1324 = vld [vmem:[#allocation4 + $0x3f8] sm:$0xff]
    %v1325 = vld [vmem:[%s4] sm:$0xff]
    %v1327 = vperm.slane %v1325, 0
    %v1328 = vperm.slane %v1325, 1
    %v1329 = vperm.slane %v1325, 2
    %v1330 = vperm.slane %v1325, 3
    %v1331 = vperm.slane %v1325, 4
    %v1332 = vperm.slane %v1325, 5
    %v1333 = vperm.slane %v1325, 6
    %v1334 = vperm.slane %v1325, 7
    %v1471 = vunpack.c.l.b16 %v1197
    %v1472 = vunpack.c.h.b16 %v1197
    %v1473 = vunpack.c.l.b16 %v1198
    %v1474 = vunpack.c.h.b16 %v1198
    %v1475 = vunpack.c.l.b16 %v1199
    %v1476 = vunpack.c.h.b16 %v1199
    %v1477 = vunpack.c.l.b16 %v1200
    %v1478 = vunpack.c.h.b16 %v1200
    %v1479 = vunpack.c.l.b16 %v1201
    %v1480 = vunpack.c.h.b16 %v1201
    %v1481 = vunpack.c.l.b16 %v1202
    %v1482 = vunpack.c.h.b16 %v1202
    %v1483 = vunpack.c.l.b16 %v1203
    %v1484 = vunpack.c.h.b16 %v1203
    %v1485 = vunpack.c.l.b16 %v1204
    %v1486 = vunpack.c.h.b16 %v1204
    %v1487 = vunpack.c.l.b16 %v1205
    %v1488 = vunpack.c.h.b16 %v1205
    %v1489 = vunpack.c.l.b16 %v1206
    %v1490 = vunpack.c.h.b16 %v1206
    %v1491 = vunpack.c.l.b16 %v1207
    %v1492 = vunpack.c.h.b16 %v1207
    %v1493 = vunpack.c.l.b16 %v1208
    %v1494 = vunpack.c.h.b16 %v1208
    %v1495 = vunpack.c.l.b16 %v1209
    %v1496 = vunpack.c.h.b16 %v1209
    %v1497 = vunpack.c.l.b16 %v1210
    %v1498 = vunpack.c.h.b16 %v1210
    %v1499 = vunpack.c.l.b16 %v1211
    %v1500 = vunpack.c.h.b16 %v1211
    %v1501 = vunpack.c.l.b16 %v1212
    %v1502 = vunpack.c.h.b16 %v1212
    %v1503 = vunpack.c.l.b16 %v1213
    %v1504 = vunpack.c.h.b16 %v1213
    %v1505 = vunpack.c.l.b16 %v1214
    %v1506 = vunpack.c.h.b16 %v1214
    %v1507 = vunpack.c.l.b16 %v1215
    %v1508 = vunpack.c.h.b16 %v1215
    %v1509 = vunpack.c.l.b16 %v1216
    %v1510 = vunpack.c.h.b16 %v1216
    %v1511 = vunpack.c.l.b16 %v1217
    %v1512 = vunpack.c.h.b16 %v1217
    %v1513 = vunpack.c.l.b16 %v1218
    %v1514 = vunpack.c.h.b16 %v1218
    %v1515 = vunpack.c.l.b16 %v1219
    %v1516 = vunpack.c.h.b16 %v1219
    %v1517 = vunpack.c.l.b16 %v1220
    %v1518 = vunpack.c.h.b16 %v1220
    %v1519 = vunpack.c.l.b16 %v1221
    %v1520 = vunpack.c.h.b16 %v1221
    %v1521 = vunpack.c.l.b16 %v1222
    %v1522 = vunpack.c.h.b16 %v1222
    %v1523 = vunpack.c.l.b16 %v1223
    %v1524 = vunpack.c.h.b16 %v1223
    %v1525 = vunpack.c.l.b16 %v1224
    %v1526 = vunpack.c.h.b16 %v1224
    %v1527 = vunpack.c.l.b16 %v1225
    %v1528 = vunpack.c.h.b16 %v1225
    %v1529 = vunpack.c.l.b16 %v1226
    %v1530 = vunpack.c.h.b16 %v1226
    %v1531 = vunpack.c.l.b16 %v1227
    %v1532 = vunpack.c.h.b16 %v1227
    %v1533 = vunpack.c.l.b16 %v1228
    %v1534 = vunpack.c.h.b16 %v1228
    %v1535 = vunpack.c.l.b16 %v1229
    %v1536 = vunpack.c.h.b16 %v1229
    %v1537 = vunpack.c.l.b16 %v1230
    %v1538 = vunpack.c.h.b16 %v1230
    %v1539 = vunpack.c.l.b16 %v1231
    %v1540 = vunpack.c.h.b16 %v1231
    %v1541 = vunpack.c.l.b16 %v1232
    %v1542 = vunpack.c.h.b16 %v1232
    %v1543 = vunpack.c.l.b16 %v1233
    %v1544 = vunpack.c.h.b16 %v1233
    %v1545 = vunpack.c.l.b16 %v1234
    %v1546 = vunpack.c.h.b16 %v1234
    %v1547 = vunpack.c.l.b16 %v1235
    %v1548 = vunpack.c.h.b16 %v1235
    %v1549 = vunpack.c.l.b16 %v1236
    %v1550 = vunpack.c.h.b16 %v1236
    %v1551 = vunpack.c.l.b16 %v1237
    %v1552 = vunpack.c.h.b16 %v1237
    %v1553 = vunpack.c.l.b16 %v1238
    %v1554 = vunpack.c.h.b16 %v1238
    %v1555 = vunpack.c.l.b16 %v1239
    %v1556 = vunpack.c.h.b16 %v1239
    %v1557 = vunpack.c.l.b16 %v1240
    %v1558 = vunpack.c.h.b16 %v1240
    %v1559 = vunpack.c.l.b16 %v1241
    %v1560 = vunpack.c.h.b16 %v1241
    %v1561 = vunpack.c.l.b16 %v1242
    %v1562 = vunpack.c.h.b16 %v1242
    %v1563 = vunpack.c.l.b16 %v1243
    %v1564 = vunpack.c.h.b16 %v1243
    %v1565 = vunpack.c.l.b16 %v1244
    %v1566 = vunpack.c.h.b16 %v1244
    %v1567 = vunpack.c.l.b16 %v1245
    %v1568 = vunpack.c.h.b16 %v1245
    %v1569 = vunpack.c.l.b16 %v1246
    %v1570 = vunpack.c.h.b16 %v1246
    %v1571 = vunpack.c.l.b16 %v1247
    %v1572 = vunpack.c.h.b16 %v1247
    %v1573 = vunpack.c.l.b16 %v1248
    %v1574 = vunpack.c.h.b16 %v1248
    %v1575 = vunpack.c.l.b16 %v1249
    %v1576 = vunpack.c.h.b16 %v1249
    %v1577 = vunpack.c.l.b16 %v1250
    %v1578 = vunpack.c.h.b16 %v1250
    %v1579 = vunpack.c.l.b16 %v1251
    %v1580 = vunpack.c.h.b16 %v1251
    %v1581 = vunpack.c.l.b16 %v1252
    %v1582 = vunpack.c.h.b16 %v1252
    %v1583 = vunpack.c.l.b16 %v1253
    %v1584 = vunpack.c.h.b16 %v1253
    %v1585 = vunpack.c.l.b16 %v1254
    %v1586 = vunpack.c.h.b16 %v1254
    %v1587 = vunpack.c.l.b16 %v1255
    %v1588 = vunpack.c.h.b16 %v1255
    %v1589 = vunpack.c.l.b16 %v1256
    %v1590 = vunpack.c.h.b16 %v1256
    %v1591 = vunpack.c.l.b16 %v1257
    %v1592 = vunpack.c.h.b16 %v1257
    %v1593 = vunpack.c.l.b16 %v1258
    %v1594 = vunpack.c.h.b16 %v1258
    %v1595 = vunpack.c.l.b16 %v1259
    %v1596 = vunpack.c.h.b16 %v1259
    %v1597 = vunpack.c.l.b16 %v1260
    %v1598 = vunpack.c.h.b16 %v1260
    %v1599 = vunpack.c.l.b16 %v1261
    %v1600 = vunpack.c.h.b16 %v1261
    %v1601 = vunpack.c.l.b16 %v1262
    %v1602 = vunpack.c.h.b16 %v1262
    %v1603 = vunpack.c.l.b16 %v1263
    %v1604 = vunpack.c.h.b16 %v1263
    %v1605 = vunpack.c.l.b16 %v1264
    %v1606 = vunpack.c.h.b16 %v1264
    %v1607 = vunpack.c.l.b16 %v1265
    %v1608 = vunpack.c.h.b16 %v1265
    %v1609 = vunpack.c.l.b16 %v1266
    %v1610 = vunpack.c.h.b16 %v1266
    %v1611 = vunpack.c.l.b16 %v1267
    %v1612 = vunpack.c.h.b16 %v1267
    %v1613 = vunpack.c.l.b16 %v1268
    %v1614 = vunpack.c.h.b16 %v1268
    %v1615 = vunpack.c.l.b16 %v1269
    %v1616 = vunpack.c.h.b16 %v1269
    %v1617 = vunpack.c.l.b16 %v1270
    %v1618 = vunpack.c.h.b16 %v1270
    %v1619 = vunpack.c.l.b16 %v1271
    %v1620 = vunpack.c.h.b16 %v1271
    %v1621 = vunpack.c.l.b16 %v1272
    %v1622 = vunpack.c.h.b16 %v1272
    %v1623 = vunpack.c.l.b16 %v1273
    %v1624 = vunpack.c.h.b16 %v1273
    %v1625 = vunpack.c.l.b16 %v1274
    %v1626 = vunpack.c.h.b16 %v1274
    %v1627 = vunpack.c.l.b16 %v1275
    %v1628 = vunpack.c.h.b16 %v1275
    %v1629 = vunpack.c.l.b16 %v1276
    %v1630 = vunpack.c.h.b16 %v1276
    %v1631 = vunpack.c.l.b16 %v1277
    %v1632 = vunpack.c.h.b16 %v1277
    %v1633 = vunpack.c.l.b16 %v1278
    %v1634 = vunpack.c.h.b16 %v1278
    %v1635 = vunpack.c.l.b16 %v1279
    %v1636 = vunpack.c.h.b16 %v1279
    %v1637 = vunpack.c.l.b16 %v1280
    %v1638 = vunpack.c.h.b16 %v1280
    %v1639 = vunpack.c.l.b16 %v1281
    %v1640 = vunpack.c.h.b16 %v1281
    %v1641 = vunpack.c.l.b16 %v1282
    %v1642 = vunpack.c.h.b16 %v1282
    %v1643 = vunpack.c.l.b16 %v1283
    %v1644 = vunpack.c.h.b16 %v1283
    %v1645 = vunpack.c.l.b16 %v1284
    %v1646 = vunpack.c.h.b16 %v1284
    %v1647 = vunpack.c.l.b16 %v1285
    %v1648 = vunpack.c.h.b16 %v1285
    %v1649 = vunpack.c.l.b16 %v1286
    %v1650 = vunpack.c.h.b16 %v1286
    %v1651 = vunpack.c.l.b16 %v1287
    %v1652 = vunpack.c.h.b16 %v1287
    %v1653 = vunpack.c.l.b16 %v1288
    %v1654 = vunpack.c.h.b16 %v1288
    %v1655 = vunpack.c.l.b16 %v1289
    %v1656 = vunpack.c.h.b16 %v1289
    %v1657 = vunpack.c.l.b16 %v1290
    %v1658 = vunpack.c.h.b16 %v1290
    %v1659 = vunpack.c.l.b16 %v1291
    %v1660 = vunpack.c.h.b16 %v1291
    %v1661 = vunpack.c.l.b16 %v1292
    %v1662 = vunpack.c.h.b16 %v1292
    %v1663 = vunpack.c.l.b16 %v1293
    %v1664 = vunpack.c.h.b16 %v1293
    %v1665 = vunpack.c.l.b16 %v1294
    %v1666 = vunpack.c.h.b16 %v1294
    %v1667 = vunpack.c.l.b16 %v1295
    %v1668 = vunpack.c.h.b16 %v1295
    %v1669 = vunpack.c.l.b16 %v1296
    %v1670 = vunpack.c.h.b16 %v1296
    %v1671 = vunpack.c.l.b16 %v1297
    %v1672 = vunpack.c.h.b16 %v1297
    %v1673 = vunpack.c.l.b16 %v1298
    %v1674 = vunpack.c.h.b16 %v1298
    %v1675 = vunpack.c.l.b16 %v1299
    %v1676 = vunpack.c.h.b16 %v1299
    %v1677 = vunpack.c.l.b16 %v1300
    %v1678 = vunpack.c.h.b16 %v1300
    %v1679 = vunpack.c.l.b16 %v1301
    %v1680 = vunpack.c.h.b16 %v1301
    %v1681 = vunpack.c.l.b16 %v1302
    %v1682 = vunpack.c.h.b16 %v1302
    %v1683 = vunpack.c.l.b16 %v1303
    %v1684 = vunpack.c.h.b16 %v1303
    %v1685 = vunpack.c.l.b16 %v1304
    %v1686 = vunpack.c.h.b16 %v1304
    %v1687 = vunpack.c.l.b16 %v1305
    %v1688 = vunpack.c.h.b16 %v1305
    %v1689 = vunpack.c.l.b16 %v1306
    %v1690 = vunpack.c.h.b16 %v1306
    %v1691 = vunpack.c.l.b16 %v1307
    %v1692 = vunpack.c.h.b16 %v1307
    %v1693 = vunpack.c.l.b16 %v1308
    %v1694 = vunpack.c.h.b16 %v1308
    %v1695 = vunpack.c.l.b16 %v1309
    %v1696 = vunpack.c.h.b16 %v1309
    %v1697 = vunpack.c.l.b16 %v1310
    %v1698 = vunpack.c.h.b16 %v1310
    %v1699 = vunpack.c.l.b16 %v1311
    %v1700 = vunpack.c.h.b16 %v1311
    %v1701 = vunpack.c.l.b16 %v1312
    %v1702 = vunpack.c.h.b16 %v1312
    %v1703 = vunpack.c.l.b16 %v1313
    %v1704 = vunpack.c.h.b16 %v1313
    %v1705 = vunpack.c.l.b16 %v1314
    %v1706 = vunpack.c.h.b16 %v1314
    %v1707 = vunpack.c.l.b16 %v1315
    %v1708 = vunpack.c.h.b16 %v1315
    %v1709 = vunpack.c.l.b16 %v1316
    %v1710 = vunpack.c.h.b16 %v1316
    %v1711 = vunpack.c.l.b16 %v1317
    %v1712 = vunpack.c.h.b16 %v1317
    %v1713 = vunpack.c.l.b16 %v1318
    %v1714 = vunpack.c.h.b16 %v1318
    %v1715 = vunpack.c.l.b16 %v1319
    %v1716 = vunpack.c.h.b16 %v1319
    %v1717 = vunpack.c.l.b16 %v1320
    %v1718 = vunpack.c.h.b16 %v1320
    %v1719 = vunpack.c.l.b16 %v1321
    %v1720 = vunpack.c.h.b16 %v1321
    %v1721 = vunpack.c.l.b16 %v1322
    %v1722 = vunpack.c.h.b16 %v1322
    %v1723 = vunpack.c.l.b16 %v1323
    %v1724 = vunpack.c.h.b16 %v1323
    %v1725 = vunpack.c.l.b16 %v1324
    %v1726 = vunpack.c.h.b16 %v1324
    %v1727 = vpack.c.b16 %v1479, %v1471
    %v1728 = vpack.c.b16 %v1480, %v1472
    %v1729 = vpack.c.b16 %v1481, %v1473
    %v1730 = vpack.c.b16 %v1482, %v1474
    %v1731 = vpack.c.b16 %v1483, %v1475
    %v1732 = vpack.c.b16 %v1484, %v1476
    %v1733 = vpack.c.b16 %v1485, %v1477
    %v1734 = vpack.c.b16 %v1486, %v1478
    %v1735 = vpack.c.b16 %v1495, %v1487
    %v1736 = vpack.c.b16 %v1496, %v1488
    %v1737 = vpack.c.b16 %v1497, %v1489
    %v1738 = vpack.c.b16 %v1498, %v1490
    %v1739 = vpack.c.b16 %v1499, %v1491
    %v1740 = vpack.c.b16 %v1500, %v1492
    %v1741 = vpack.c.b16 %v1501, %v1493
    %v1742 = vpack.c.b16 %v1502, %v1494
    %v1743 = vpack.c.b16 %v1511, %v1503
    %v1744 = vpack.c.b16 %v1512, %v1504
    %v1745 = vpack.c.b16 %v1513, %v1505
    %v1746 = vpack.c.b16 %v1514, %v1506
    %v1747 = vpack.c.b16 %v1515, %v1507
    %v1748 = vpack.c.b16 %v1516, %v1508
    %v1749 = vpack.c.b16 %v1517, %v1509
    %v1750 = vpack.c.b16 %v1518, %v1510
    %v1751 = vpack.c.b16 %v1527, %v1519
    %v1752 = vpack.c.b16 %v1528, %v1520
    %v1753 = vpack.c.b16 %v1529, %v1521
    %v1754 = vpack.c.b16 %v1530, %v1522
    %v1755 = vpack.c.b16 %v1531, %v1523
    %v1756 = vpack.c.b16 %v1532, %v1524
    %v1757 = vpack.c.b16 %v1533, %v1525
    %v1758 = vpack.c.b16 %v1534, %v1526
    %v1759 = vpack.c.b16 %v1543, %v1535
    %v1760 = vpack.c.b16 %v1544, %v1536
    %v1761 = vpack.c.b16 %v1545, %v1537
    %v1762 = vpack.c.b16 %v1546, %v1538
    %v1763 = vpack.c.b16 %v1547, %v1539
    %v1764 = vpack.c.b16 %v1548, %v1540
    %v1765 = vpack.c.b16 %v1549, %v1541
    %v1766 = vpack.c.b16 %v1550, %v1542
    %v1767 = vpack.c.b16 %v1559, %v1551
    %v1768 = vpack.c.b16 %v1560, %v1552
    %v1769 = vpack.c.b16 %v1561, %v1553
    %v1770 = vpack.c.b16 %v1562, %v1554
    %v1771 = vpack.c.b16 %v1563, %v1555
    %v1772 = vpack.c.b16 %v1564, %v1556
    %v1773 = vpack.c.b16 %v1565, %v1557
    %v1774 = vpack.c.b16 %v1566, %v1558
    %v1775 = vpack.c.b16 %v1575, %v1567
    %v1776 = vpack.c.b16 %v1576, %v1568
    %v1777 = vpack.c.b16 %v1577, %v1569
    %v1778 = vpack.c.b16 %v1578, %v1570
    %v1779 = vpack.c.b16 %v1579, %v1571
    %v1780 = vpack.c.b16 %v1580, %v1572
    %v1781 = vpack.c.b16 %v1581, %v1573
    %v1782 = vpack.c.b16 %v1582, %v1574
    %v1783 = vpack.c.b16 %v1591, %v1583
    %v1784 = vpack.c.b16 %v1592, %v1584
    %v1785 = vpack.c.b16 %v1593, %v1585
    %v1786 = vpack.c.b16 %v1594, %v1586
    %v1787 = vpack.c.b16 %v1595, %v1587
    %v1788 = vpack.c.b16 %v1596, %v1588
    %v1789 = vpack.c.b16 %v1597, %v1589
    %v1790 = vpack.c.b16 %v1598, %v1590
    %v1791 = vpack.c.b16 %v1607, %v1599
    %v1792 = vpack.c.b16 %v1608, %v1600
    %v1793 = vpack.c.b16 %v1609, %v1601
    %v1794 = vpack.c.b16 %v1610, %v1602
    %v1795 = vpack.c.b16 %v1611, %v1603
    %v1796 = vpack.c.b16 %v1612, %v1604
    %v1797 = vpack.c.b16 %v1613, %v1605
    %v1798 = vpack.c.b16 %v1614, %v1606
    %v1799 = vpack.c.b16 %v1623, %v1615
    %v1800 = vpack.c.b16 %v1624, %v1616
    %v1801 = vpack.c.b16 %v1625, %v1617
    %v1802 = vpack.c.b16 %v1626, %v1618
    %v1803 = vpack.c.b16 %v1627, %v1619
    %v1804 = vpack.c.b16 %v1628, %v1620
    %v1805 = vpack.c.b16 %v1629, %v1621
    %v1806 = vpack.c.b16 %v1630, %v1622
    %v1807 = vpack.c.b16 %v1639, %v1631
    %v1808 = vpack.c.b16 %v1640, %v1632
    %v1809 = vpack.c.b16 %v1641, %v1633
    %v1810 = vpack.c.b16 %v1642, %v1634
    %v1811 = vpack.c.b16 %v1643, %v1635
    %v1812 = vpack.c.b16 %v1644, %v1636
    %v1813 = vpack.c.b16 %v1645, %v1637
    %v1814 = vpack.c.b16 %v1646, %v1638
    %v1815 = vpack.c.b16 %v1655, %v1647
    %v1816 = vpack.c.b16 %v1656, %v1648
    %v1817 = vpack.c.b16 %v1657, %v1649
    %v1818 = vpack.c.b16 %v1658, %v1650
    %v1819 = vpack.c.b16 %v1659, %v1651
    %v1820 = vpack.c.b16 %v1660, %v1652
    %v1821 = vpack.c.b16 %v1661, %v1653
    %v1822 = vpack.c.b16 %v1662, %v1654
    %v1823 = vpack.c.b16 %v1671, %v1663
    %v1824 = vpack.c.b16 %v1672, %v1664
    %v1825 = vpack.c.b16 %v1673, %v1665
    %v1826 = vpack.c.b16 %v1674, %v1666
    %v1827 = vpack.c.b16 %v1675, %v1667
    %v1828 = vpack.c.b16 %v1676, %v1668
    %v1829 = vpack.c.b16 %v1677, %v1669
    %v1830 = vpack.c.b16 %v1678, %v1670
    %v1831 = vpack.c.b16 %v1687, %v1679
    %v1832 = vpack.c.b16 %v1688, %v1680
    %v1833 = vpack.c.b16 %v1689, %v1681
    %v1834 = vpack.c.b16 %v1690, %v1682
    %v1835 = vpack.c.b16 %v1691, %v1683
    %v1836 = vpack.c.b16 %v1692, %v1684
    %v1837 = vpack.c.b16 %v1693, %v1685
    %v1838 = vpack.c.b16 %v1694, %v1686
    %v1839 = vpack.c.b16 %v1703, %v1695
    %v1840 = vpack.c.b16 %v1704, %v1696
    %v1841 = vpack.c.b16 %v1705, %v1697
    %v1842 = vpack.c.b16 %v1706, %v1698
    %v1843 = vpack.c.b16 %v1707, %v1699
    %v1844 = vpack.c.b16 %v1708, %v1700
    %v1845 = vpack.c.b16 %v1709, %v1701
    %v1846 = vpack.c.b16 %v1710, %v1702
    %v1847 = vpack.c.b16 %v1719, %v1711
    %v1848 = vpack.c.b16 %v1720, %v1712
    %v1849 = vpack.c.b16 %v1721, %v1713
    %v1850 = vpack.c.b16 %v1722, %v1714
    %v1851 = vpack.c.b16 %v1723, %v1715
    %v1852 = vpack.c.b16 %v1724, %v1716
    %v1853 = vpack.c.b16 %v1725, %v1717
    %v1854 = vpack.c.b16 %v1726, %v1718
    %1983 = vmatpush.bf16.msra.mxu0 %v1783
    %1984 = vmatpush.bf16.msra.mxu0 %v1775
    %1985 = vmatpush.bf16.msra.mxu0 %v1767
    %1986 = vmatpush.bf16.msra.mxu0 %v1759
    %1987 = vmatpush.bf16.msra.mxu0 %v1751
    %1988 = vmatpush.bf16.msra.mxu0 %v1743
    %1989 = vmatpush.bf16.msra.mxu0 %v1735
    %1990 = vmatpush.bf16.msra.mxu0 %v1727
    %1991 = vmatmul.bf16.gmra.mxu0 %v1195
    %v1992 = vpop.f32.mrf.mxu0
    %v1993 = vadd.f32 %v1327, %v1992
    %v1994 = vpop.f32.mrf.mxu0
    %1995 = vdwg.mxu0
    %1996 = vmatpush.bf16.msra.mxu0 %v1847
    %1997 = vmatpush.bf16.msra.mxu0 %v1839
    %1998 = vmatpush.bf16.msra.mxu0 %v1831
    %1999 = vmatpush.bf16.msra.mxu0 %v1823
    %2000 = vmatpush.bf16.msra.mxu0 %v1815
    %2001 = vmatpush.bf16.msra.mxu0 %v1807
    %2002 = vmatpush.bf16.msra.mxu0 %v1799
    %2003 = vmatpush.bf16.msra.mxu0 %v1791
    %2004 = vmatmul.bf16.gmra.mxu0 %v1196
    %v2005 = vpop.f32.mrf.mxu0
    %v2006 = vadd.f32 %v1993, %v2005
    %v2007 = vpop.f32.mrf.mxu0
    %2008 = vdwg.mxu0
    %2009 = vmatpush.bf16.msra.mxu0 %v1784
    %2010 = vmatpush.bf16.msra.mxu0 %v1776
    %2011 = vmatpush.bf16.msra.mxu0 %v1768
    %2012 = vmatpush.bf16.msra.mxu0 %v1760
    %2013 = vmatpush.bf16.msra.mxu0 %v1752
    %2014 = vmatpush.bf16.msra.mxu0 %v1744
    %2015 = vmatpush.bf16.msra.mxu0 %v1736
    %2016 = vmatpush.bf16.msra.mxu0 %v1728
    %2017 = vmatmul.bf16.gmra.mxu0 %v1195
    %v2018 = vpop.f32.mrf.mxu0
    %v2019 = vadd.f32 %v1328, %v2018
    %v2020 = vpop.f32.mrf.mxu0
    %2021 = vdwg.mxu0
    %2022 = vmatpush.bf16.msra.mxu0 %v1848
    %2023 = vmatpush.bf16.msra.mxu0 %v1840
    %2024 = vmatpush.bf16.msra.mxu0 %v1832
    %2025 = vmatpush.bf16.msra.mxu0 %v1824
    %2026 = vmatpush.bf16.msra.mxu0 %v1816
    %2027 = vmatpush.bf16.msra.mxu0 %v1808
    %2028 = vmatpush.bf16.msra.mxu0 %v1800
    %2029 = vmatpush.bf16.msra.mxu0 %v1792
    %2030 = vmatmul.bf16.gmra.mxu0 %v1196
    %v2031 = vpop.f32.mrf.mxu0
    %v2032 = vadd.f32 %v2019, %v2031
    %v2033 = vpop.f32.mrf.mxu0
    %2034 = vdwg.mxu0
    %2035 = vmatpush.bf16.msra.mxu0 %v1785
    %2036 = vmatpush.bf16.msra.mxu0 %v1777
    %2037 = vmatpush.bf16.msra.mxu0 %v1769
    %2038 = vmatpush.bf16.msra.mxu0 %v1761
    %2039 = vmatpush.bf16.msra.mxu0 %v1753
    %2040 = vmatpush.bf16.msra.mxu0 %v1745
    %2041 = vmatpush.bf16.msra.mxu0 %v1737
    %2042 = vmatpush.bf16.msra.mxu0 %v1729
    %2043 = vmatmul.bf16.gmra.mxu0 %v1195
    %v2044 = vpop.f32.mrf.mxu0
    %v2045 = vadd.f32 %v1329, %v2044
    %v2046 = vpop.f32.mrf.mxu0
    %2047 = vdwg.mxu0
    %2048 = vmatpush.bf16.msra.mxu0 %v1849
    %2049 = vmatpush.bf16.msra.mxu0 %v1841
    %2050 = vmatpush.bf16.msra.mxu0 %v1833
    %2051 = vmatpush.bf16.msra.mxu0 %v1825
    %2052 = vmatpush.bf16.msra.mxu0 %v1817
    %2053 = vmatpush.bf16.msra.mxu0 %v1809
    %2054 = vmatpush.bf16.msra.mxu0 %v1801
    %2055 = vmatpush.bf16.msra.mxu0 %v1793
    %2056 = vmatmul.bf16.gmra.mxu0 %v1196
    %v2057 = vpop.f32.mrf.mxu0
    %v2058 = vadd.f32 %v2045, %v2057
    %v2059 = vpop.f32.mrf.mxu0
    %2060 = vdwg.mxu0
    %2061 = vmatpush.bf16.msra.mxu0 %v1786
    %2062 = vmatpush.bf16.msra.mxu0 %v1778
    %2063 = vmatpush.bf16.msra.mxu0 %v1770
    %2064 = vmatpush.bf16.msra.mxu0 %v1762
    %2065 = vmatpush.bf16.msra.mxu0 %v1754
    %2066 = vmatpush.bf16.msra.mxu0 %v1746
    %2067 = vmatpush.bf16.msra.mxu0 %v1738
    %2068 = vmatpush.bf16.msra.mxu0 %v1730
    %2069 = vmatmul.bf16.gmra.mxu0 %v1195
    %v2070 = vpop.f32.mrf.mxu0
    %v2071 = vadd.f32 %v1330, %v2070
    %v2072 = vpop.f32.mrf.mxu0
    %2073 = vdwg.mxu0
    %2074 = vmatpush.bf16.msra.mxu0 %v1850
    %2075 = vmatpush.bf16.msra.mxu0 %v1842
    %2076 = vmatpush.bf16.msra.mxu0 %v1834
    %2077 = vmatpush.bf16.msra.mxu0 %v1826
    %2078 = vmatpush.bf16.msra.mxu0 %v1818
    %2079 = vmatpush.bf16.msra.mxu0 %v1810
    %2080 = vmatpush.bf16.msra.mxu0 %v1802
    %2081 = vmatpush.bf16.msra.mxu0 %v1794
    %2082 = vmatmul.bf16.gmra.mxu0 %v1196
    %v2083 = vpop.f32.mrf.mxu0
    %v2084 = vadd.f32 %v2071, %v2083
    %v2085 = vpop.f32.mrf.mxu0
    %2086 = vdwg.mxu0
    %2087 = vmatpush.bf16.msra.mxu0 %v1787
    %2088 = vmatpush.bf16.msra.mxu0 %v1779
    %2089 = vmatpush.bf16.msra.mxu0 %v1771
    %2090 = vmatpush.bf16.msra.mxu0 %v1763
    %2091 = vmatpush.bf16.msra.mxu0 %v1755
    %2092 = vmatpush.bf16.msra.mxu0 %v1747
    %2093 = vmatpush.bf16.msra.mxu0 %v1739
    %2094 = vmatpush.bf16.msra.mxu0 %v1731
    %2095 = vmatmul.bf16.gmra.mxu0 %v1195
    %v2096 = vpop.f32.mrf.mxu0
    %v2097 = vadd.f32 %v1331, %v2096
    %v2098 = vpop.f32.mrf.mxu0
    %2099 = vdwg.mxu0
    %2100 = vmatpush.bf16.msra.mxu0 %v1851
    %2101 = vmatpush.bf16.msra.mxu0 %v1843
    %2102 = vmatpush.bf16.msra.mxu0 %v1835
    %2103 = vmatpush.bf16.msra.mxu0 %v1827
    %2104 = vmatpush.bf16.msra.mxu0 %v1819
    %2105 = vmatpush.bf16.msra.mxu0 %v1811
    %2106 = vmatpush.bf16.msra.mxu0 %v1803
    %2107 = vmatpush.bf16.msra.mxu0 %v1795
    %2108 = vmatmul.bf16.gmra.mxu0 %v1196
    %v2109 = vpop.f32.mrf.mxu0
    %v2110 = vadd.f32 %v2097, %v2109
    %v2111 = vpop.f32.mrf.mxu0
    %2112 = vdwg.mxu0
    %2113 = vmatpush.bf16.msra.mxu0 %v1788
    %2114 = vmatpush.bf16.msra.mxu0 %v1780
    %2115 = vmatpush.bf16.msra.mxu0 %v1772
    %2116 = vmatpush.bf16.msra.mxu0 %v1764
    %2117 = vmatpush.bf16.msra.mxu0 %v1756
    %2118 = vmatpush.bf16.msra.mxu0 %v1748
    %2119 = vmatpush.bf16.msra.mxu0 %v1740
    %2120 = vmatpush.bf16.msra.mxu0 %v1732
    %2121 = vmatmul.bf16.gmra.mxu0 %v1195
    %v2122 = vpop.f32.mrf.mxu0
    %v2123 = vadd.f32 %v1332, %v2122
    %v2124 = vpop.f32.mrf.mxu0
    %2125 = vdwg.mxu0
    %2126 = vmatpush.bf16.msra.mxu0 %v1852
    %2127 = vmatpush.bf16.msra.mxu0 %v1844
    %2128 = vmatpush.bf16.msra.mxu0 %v1836
    %2129 = vmatpush.bf16.msra.mxu0 %v1828
    %2130 = vmatpush.bf16.msra.mxu0 %v1820
    %2131 = vmatpush.bf16.msra.mxu0 %v1812
    %2132 = vmatpush.bf16.msra.mxu0 %v1804
    %2133 = vmatpush.bf16.msra.mxu0 %v1796
    %2134 = vmatmul.bf16.gmra.mxu0 %v1196
    %v2135 = vpop.f32.mrf.mxu0
    %v2136 = vadd.f32 %v2123, %v2135
    %v2137 = vpop.f32.mrf.mxu0
    %2138 = vdwg.mxu0
    %2139 = vmatpush.bf16.msra.mxu0 %v1789
    %2140 = vmatpush.bf16.msra.mxu0 %v1781
    %2141 = vmatpush.bf16.msra.mxu0 %v1773
    %2142 = vmatpush.bf16.msra.mxu0 %v1765
    %2143 = vmatpush.bf16.msra.mxu0 %v1757
    %2144 = vmatpush.bf16.msra.mxu0 %v1749
    %2145 = vmatpush.bf16.msra.mxu0 %v1741
    %2146 = vmatpush.bf16.msra.mxu0 %v1733
    %2147 = vmatmul.bf16.gmra.mxu0 %v1195
    %v2148 = vpop.f32.mrf.mxu0
    %v2149 = vadd.f32 %v1333, %v2148
    %v2150 = vpop.f32.mrf.mxu0
    %2151 = vdwg.mxu0
    %2152 = vmatpush.bf16.msra.mxu0 %v1853
    %2153 = vmatpush.bf16.msra.mxu0 %v1845
    %2154 = vmatpush.bf16.msra.mxu0 %v1837
    %2155 = vmatpush.bf16.msra.mxu0 %v1829
    %2156 = vmatpush.bf16.msra.mxu0 %v1821
    %2157 = vmatpush.bf16.msra.mxu0 %v1813
    %2158 = vmatpush.bf16.msra.mxu0 %v1805
    %2159 = vmatpush.bf16.msra.mxu0 %v1797
    %2160 = vmatmul.bf16.gmra.mxu0 %v1196
    %v2161 = vpop.f32.mrf.mxu0
    %v2162 = vadd.f32 %v2149, %v2161
    %v2163 = vpop.f32.mrf.mxu0
    %2164 = vdwg.mxu0
    %2165 = vmatpush.bf16.msra.mxu0 %v1790
    %2166 = vmatpush.bf16.msra.mxu0 %v1782
    %2167 = vmatpush.bf16.msra.mxu0 %v1774
    %2168 = vmatpush.bf16.msra.mxu0 %v1766
    %2169 = vmatpush.bf16.msra.mxu0 %v1758
    %2170 = vmatpush.bf16.msra.mxu0 %v1750
    %2171 = vmatpush.bf16.msra.mxu0 %v1742
    %2172 = vmatpush.bf16.msra.mxu0 %v1734
    %2173 = vmatmul.bf16.gmra.mxu0 %v1195
    %v2174 = vpop.f32.mrf.mxu0
    %v2175 = vadd.f32 %v1334, %v2174
    %v2176 = vpop.f32.mrf.mxu0
    %2177 = vdwg.mxu0
    %2178 = vmatpush.bf16.msra.mxu0 %v1854
    %2179 = vmatpush.bf16.msra.mxu0 %v1846
    %2180 = vmatpush.bf16.msra.mxu0 %v1838
    %2181 = vmatpush.bf16.msra.mxu0 %v1830
    %2182 = vmatpush.bf16.msra.mxu0 %v1822
    %2183 = vmatpush.bf16.msra.mxu0 %v1814
    %2184 = vmatpush.bf16.msra.mxu0 %v1806
    %2185 = vmatpush.bf16.msra.mxu0 %v1798
    %2186 = vmatmul.bf16.gmra.mxu0 %v1196
    %v2187 = vpop.f32.mrf.mxu0
    %v2188 = vadd.f32 %v2175, %v2187
    %v2189 = vpop.f32.mrf.mxu0
    %2190 = vdwg.mxu0
    %v2199 = vrot.slane %v2032, 6
    %v2200 = vrot.slane %v2058, 4
    %v2201 = vrot.slane %v2084, 2
    %v2202 = vrot.slane %v2136, 6
    %v2203 = vrot.slane %v2162, 4
    %v2204 = vrot.slane %v2188, 2
    %vm2205 = vcmask 1041408
    %v2206 = vsel %vm2205, %v2006, %v2199
    %vm2207 = vcmask 1045508
    %v2208 = vsel %vm2207, %v2200, %v2201
    %vm2209 = vcmask 1043456
    %v2210 = vsel %vm2209, %v2206, %v2208
    %v2211 = vsel %vm2205, %v2110, %v2202
    %v2212 = vsel %vm2207, %v2203, %v2204
    %v2213 = vsel %vm2209, %v2211, %v2212
    %vm2214 = vcmask 1043458
    %v2215 = vsel %vm2214, %v2006, %v2199
    %vm2216 = vcmask 1045504
    %v2217 = vsel %vm2216, %v2201, %v2200
    %vm2218 = vcmask 1045506
    %v2219 = vsel %vm2218, %v2215, %v2217
    %v2220 = vrot.slane %v2219, 2
    %v2221 = vsel %vm2214, %v2110, %v2202
    %v2222 = vsel %vm2216, %v2204, %v2203
    %v2223 = vsel %vm2218, %v2221, %v2222
    %v2224 = vrot.slane %v2223, 2
    %v2225 = vsel %vm2207, %v2006, %v2199
    %v2226 = vsel %vm2205, %v2200, %v2201
    %v2227 = vsel %vm2209, %v2226, %v2225
    %v2228 = vrot.slane %v2227, 4
    %v2229 = vsel %vm2207, %v2110, %v2202
    %v2230 = vsel %vm2205, %v2203, %v2204
    %v2231 = vsel %vm2209, %v2230, %v2229
    %v2232 = vrot.slane %v2231, 4
    %v2233 = vsel %vm2216, %v2199, %v2006
    %v2234 = vsel %vm2214, %v2200, %v2201
    %v2235 = vsel %vm2218, %v2234, %v2233
    %v2236 = vrot.slane %v2235, 6
    %v2237 = vsel %vm2216, %v2202, %v2110
    %v2238 = vsel %vm2214, %v2203, %v2204
    %v2239 = vsel %vm2218, %v2238, %v2237
    %v2240 = vrot.slane %v2239, 6
    %2249 = vst [vmem:[#allocation6] sm:$0xff] %v2210
    %2250 = vst [vmem:[#allocation6 + $0x8] sm:$0xff] %v2213
    %2251 = vst [vmem:[#allocation6 + $0x10] sm:$0xff] %v2220
    %2252 = vst [vmem:[#allocation6 + $0x18] sm:$0xff] %v2224
    %2253 = vst [vmem:[#allocation6 + $0x20] sm:$0xff] %v2228
    %2254 = vst [vmem:[#allocation6 + $0x28] sm:$0xff] %v2232
    %2255 = vst [vmem:[#allocation6 + $0x30] sm:$0xff] %v2236
    %2256 = vst [vmem:[#allocation6 + $0x38] sm:$0xff] %v2240
    // Predicated region
    $region30: #{branch_1_fun.1} parent=1 // pred_check
      _
    $region31: #{branch_1_fun.1} parent=1 // pred_check_branch
      %2258 = sbr.rel (0) target = $region33
    $region32: #{branch_1_fun.1} parent=1 // pred_region
      // Predicated region
      $region34: #{branch_1_fun.1} parent=32 // pred_check
        _
      $region35: #{branch_1_fun.1} parent=32 // pred_check_branch
        %2260 = sbr.rel (0) target = $region37
      $region36: #{branch_1_fun.1} parent=32 // pred_region
        // Predicated region
        $region38: #{branch_1_fun.1} parent=36 // pred_check
          _
        $region39: #{branch_1_fun.1} parent=36 // pred_check_branch
          %2262 = sbr.rel (0) target = $region41
        $region40: #{branch_1_fun.1} parent=36 // pred_region
          loop: start=0, step=1, limit=1
          $region42: #{branch_1_fun.1} parent=40 // loop_pre_header
            _
          $region43: #{branch_1_fun.1} parent=40 // loop_header
            %s2264 = sphi 0, %s2268
            %p2265 = scmp.ge.s32.totalorder %s2264, 1
            %s2269 = sphi [#allocation6], [#allocation6]
            %s2270 = sphi %s5, %s5
          $region44: #{branch_1_fun.1} parent=40 // loop_header_branch
            %2267 = sbr.rel (%p2265) target = $region48
          $region45: #{branch_1_fun.1} parent=40 // loop_body
            %v2271 = vld [vmem:[%s2269] sm:$0xff]
            %2272 = vst [vmem:[%s2270] sm:$0xff] %v2271
            %v2273 = vld [vmem:[%s2269 + $0x8] sm:$0xff]
            %2274 = vst [vmem:[%s2270 + $0x8] sm:$0xff] %v2273
          $region46: #{branch_1_fun.1} parent=40 // loop_footer
            %s2268 = sadd.s32 1, %s2264
          $region47: #{branch_1_fun.1} parent=40 // loop_footer_branch
            %2263 = sbr.rel target = $region43
          $region48: #{branch_1_fun.1} parent=40 // loop_exit
            _
        $region41: #{branch_1_fun.1} parent=36 // pred_fallthru
          _
        // Predicated region
        $region49: #{branch_1_fun.1} parent=36 // pred_check
          _
        $region50: #{branch_1_fun.1} parent=36 // pred_check_branch
          %2276 = sbr.rel target = $region52
        $region51: #{branch_1_fun.1} parent=36 // pred_region
          _
        $region52: #{branch_1_fun.1} parent=36 // pred_fallthru
          _
      $region37: #{branch_1_fun.1} parent=32 // pred_fallthru
        _
      %2277 = vnop
    $region33: #{branch_1_fun.1} parent=1 // pred_fallthru
      _
    // Predicated region
    $region53: #{branch_1_fun.1} parent=1 // pred_check
      _
    $region54: #{branch_1_fun.1} parent=1 // pred_check_branch
      %2279 = sbr.rel (0) target = $region56
    $region55: #{branch_1_fun.1} parent=1 // pred_region
      _
    $region56: #{branch_1_fun.1} parent=1 // pred_fallthru
      _
    %2280 = vsyncpa [#allocation3], 1
    %2281 = vsyncpa [#allocation5], 1

</llo_original>
